<compile_context>
chip_gen: v7x
topology: tpu7x:2x2x1
jax: 0.10.0
libtpu: 0.0.40
codegen_flags: <defaults>
</compile_context>

<pallas_src>
import functools

import jax
import jax.numpy as jnp
import numpy as np
from jax.experimental import pallas as pl
from jax.experimental.pallas import tpu as pltpu

LRELU_SLOPE = 0.3
EPS = 1e-5  # nn.LayerNorm default


# ---------------------------------------------------------------------------
# pltpu.roll direction / availability probe (memoized, one tiny compile).
# ---------------------------------------------------------------------------
_ROLL_DIR_CACHE = {}


def _probe_roll_direction(rows, cols, dtype):
    """+1 if pltpu.roll(x, s, axis=0) matches jnp.roll, -1 if it is the
    opposite rotation, 0 if unavailable (=> use the slice fallback)."""
    key = (rows, cols, jnp.dtype(dtype).name)
    if key in _ROLL_DIR_CACHE:
        return _ROLL_DIR_CACHE[key]

    def _kernel(x_ref, o_ref):
        o_ref[...] = pltpu.roll(x_ref[...], 1, axis=0)

    direction = 0
    try:
        base = (jnp.arange(rows, dtype=jnp.int32) % 251).astype(dtype)
        x = jnp.broadcast_to(base[:, None], (rows, cols))
        y = pl.pallas_call(
            _kernel, out_shape=jax.ShapeDtypeStruct((rows, cols), dtype))(x)
        y = np.asarray(jax.block_until_ready(y))
        xn = np.asarray(x)
        if np.array_equal(y, np.roll(xn, 1, axis=0)):
            direction = 1
        elif np.array_equal(y, np.roll(xn, -1, axis=0)):
            direction = -1
    except Exception:
        direction = 0
    _ROLL_DIR_CACHE[key] = direction
    return direction


# ---------------------------------------------------------------------------
# Kernel
# ---------------------------------------------------------------------------
def dwconv_kernel(x_ref, halo_ref, g_ref, bta_ref, wdw_ref, bdw_ref, wout_ref,
                  bout_ref, o_ref, *, kernel_size, expansion, block_t,
                  halo_rows, seq_len, roll_dir):
    K, E, tT, H = kernel_size, expansion, block_t, halo_rows
    pad = K // 2
    t = pl.program_id(1)

    gamma = g_ref[...]      # (1, D) f32
    beta = bta_ref[...]     # (1, D) f32

    def layer_norm(v):
        v = v.astype(jnp.float32)
        mean = jnp.mean(v, axis=-1, keepdims=True)
        c = v - mean                                   # hoisted; reused below
        var = jnp.mean(c * c, axis=-1, keepdims=True)
        return c * jax.lax.rsqrt(var + EPS) * gamma + beta

    xm = layer_norm(x_ref[0])          # (tT, D) main tile
    xh = layer_norm(halo_ref[0, 0])    # (H, D) halo rows [back | unused | front]

    # PyTorch zero-pads AFTER LayerNorm -> zero every row outside [0, seq_len).
    if seq_len % tT != 0:              # main rows only need masking when ragged
        row_m = t * tT + jax.lax.broadcasted_iota(jnp.int32, (tT, 1), 0)
        xm = jnp.where(row_m < seq_len, xm, 0.0)
    j = jax.lax.broadcasted_iota(jnp.int32, (H, 1), 0)
    row_h = jnp.where(j < pad, (t + 1) * tT + j, t * tT + j - H)
    xh = jnp.where((row_h >= 0) & (row_h < seq_len), xh, 0.0)

    cdt = wdw_ref.dtype                # depthwise compute dtype (f32 or bf16)
    xm = xm.astype(cdt)
    xh = xh.astype(cdt)

    # K time-shifted (tT, D) views: shifted[k][i] == post-LN x[t*tT + i + k - pad]
    if roll_dir != 0:
        # Sublane-ALIGNED stack [main(tT) ; halo(H)].  Back rows sit at
        # [tT, tT+pad), front rows at [tT+H-pad, tT+H), so one XLU roll by
        # (pad - k) brings exactly the right halo rows to the tile edges.
        stacked = jnp.concatenate([xm, xh], axis=0)          # (tT + H, D)
        S = tT + H
        shifted = []
        for k in range(K):
            amt = (roll_dir * (pad - k)) % S
            v = stacked if amt == 0 else pltpu.roll(stacked, amt, axis=0)
            shifted.append(v[:tT, :])
    else:
        # Known-correct fallback: window in time order + static slices.
        window = jnp.concatenate([xh[H - pad:, :], xm, xh[:pad, :]], axis=0)
        shifted = [window[k:k + tT, :] for k in range(K)]

    # Depthwise conv (VPU) + LeakyReLU + per-slot 1x1 conv (MXU, f32 accum).
    wdw = wdw_ref[...]                 # (E, K, D)
    bdw = bdw_ref[...]                 # (E, D)
    acc = None
    for e in range(E):
        dw = shifted[0] * wdw[e, 0]
        for k in range(1, K):
            dw = dw + shifted[k] * wdw[e, k]
        dw = dw + bdw[e]
        a = jnp.maximum(dw, LRELU_SLOPE * dw)        # LeakyReLU (0 < slope < 1)
        p = jnp.dot(a.astype(wout_ref.dtype), wout_ref[e],
                    preferred_element_type=jnp.float32)
        acc = p if acc is None else acc + p
    o_ref[0] = (acc + bout_ref[...]).astype(o_ref.dtype)


# ---------------------------------------------------------------------------
# Parameter packing + wrapper
# ---------------------------------------------------------------------------
def pack_params(gamma, beta, w_dw, b_dw, w_out, b_out, kernel_size=7,
                expansion=4, use_bf16=True):
    """Re-pack PyTorch Conv1d-layout weights ONCE (at parameter-load time).
       w_dw: (D*E, 1, K), b_dw: (D*E,), w_out: (D, D*E, 1), b_out: (D,).
       use_bf16: bf16 depthwise + pointwise weights (v6e/v7x fast path);
       keep False on v5e or when full f32 accuracy is required."""
    assert kernel_size % 2 == 1, "same-padding path assumes odd kernel_size"
    D = gamma.shape[0]
    E, K = expansion, kernel_size
    # depthwise: out channel o = d*E + e uses input channel d
    w_dw_r = jnp.transpose(w_dw[:, 0, :].reshape(D, E, K), (1, 2, 0))    # (E,K,D)
    b_dw_r = b_dw.reshape(D, E).T                                        # (E,D)
    # pointwise: (E, D_in, D_out) -> one (D, D) matmul per expansion slot
    w_out_r = jnp.transpose(w_out[:, :, 0].reshape(D, D, E), (2, 1, 0))  # (E,D,D)
    if use_bf16:
        w_dw_r = w_dw_r.astype(jnp.bfloat16)
        b_dw_r = b_dw_r.astype(jnp.bfloat16)
        w_out_r = w_out_r.astype(jnp.bfloat16)
    return dict(gamma=gamma.reshape(1, D), beta=beta.reshape(1, D),
                w_dw=w_dw_r, b_dw=b_dw_r, w_out=w_out_r,
                b_out=b_out.reshape(1, D), kernel_size=K, expansion=E)


def depthwise_conv_module(x, params, block_t=1024):
    """x: (B, T, D) float32; params from pack_params."""
    B, T, D = x.shape
    K = params["kernel_size"]
    E = params["expansion"]
    pad = K // 2

    # Time tile: multiple of 8 sublanes.  Per-step VMEM ~ 2*2*tT*D*4 bytes
    # (double-buffered in/out tiles) + weights, so block_t=1024 is a few MiB
    # at D<=512.  TODO(synk): on v7x at very large D, single-buffer the
    # constant-weight specs (pipeline_mode=pl.Buffered(1)) and set
    # pltpu.CompilerParams(vmem_limit_bytes=...) to stay inside 64 MiB VMEM.
    tT = max(8, (min(block_t, T) // 8) * 8)
    nT = pl.cdiv(T, tT)
    HALO = max(8, -(-2 * pad // 8) * 8)  # halo rows per tile (>=2*pad, mult of 8)
    assert tT >= pad, "time tile smaller than conv half-width"

    # Tiny per-tile halo gather (B, nT, HALO, D): rows [0, pad) = the pad rows
    # just AFTER the tile, rows [HALO-pad, HALO) = the pad rows just BEFORE it.
    # Out-of-sequence rows are masked post-LN in the kernel.  This replaces the
    # previous full jnp.pad copy of x.
    tt = jnp.arange(nT, dtype=jnp.int32)[:, None]
    jj = jnp.arange(HALO, dtype=jnp.int32)[None, :]
    idx = jnp.where(jj < pad, (tt + 1) * tT + jj, tt * tT + jj - HALO)
    idx = jnp.clip(idx, 0, T - 1)
    halo = jnp.take(x, idx.reshape(-1), axis=1).reshape(B, nT, HALO, D)

    roll_dir = _probe_roll_direction(tT + HALO, D, params["w_dw"].dtype)

    kernel = functools.partial(
        dwconv_kernel, kernel_size=K, expansion=E, block_t=tT,
        halo_rows=HALO, seq_len=T, roll_dir=roll_dir)

    return pl.pallas_call(
        kernel,
        out_shape=jax.ShapeDtypeStruct((B, T, D), x.dtype),
        grid=(B, nT),
        in_specs=[
            pl.BlockSpec((1, tT, D), lambda b, t: (b, t, 0)),          # x tile
            pl.BlockSpec((1, 1, HALO, D), lambda b, t: (b, t, 0, 0)),  # halo
            pl.BlockSpec((1, D), lambda b, t: (0, 0)),                 # gamma
            pl.BlockSpec((1, D), lambda b, t: (0, 0)),                 # beta
            pl.BlockSpec((E, K, D), lambda b, t: (0, 0, 0)),           # w_dw
            pl.BlockSpec((E, D), lambda b, t: (0, 0)),                 # b_dw
            pl.BlockSpec((E, D, D), lambda b, t: (0, 0, 0)),           # w_out
            pl.BlockSpec((1, D), lambda b, t: (0, 0)),                 # b_out
        ],
        out_specs=pl.BlockSpec((1, tT, D), lambda b, t: (b, t, 0)),
        compiler_params=pltpu.CompilerParams(
            dimension_semantics=("parallel", "parallel")),
    )(x, halo, params["gamma"], params["beta"], params["w_dw"],
      params["b_dw"], params["w_out"], params["b_out"])


# ---------------------------------------------------------------------------
# Pure-JAX reference (matches the PyTorch forward exactly)
# ---------------------------------------------------------------------------
def reference(x, gamma, beta, w_dw, b_dw, w_out, b_out, kernel_size=7):
    pad = kernel_size // 2
    mean = x.mean(-1, keepdims=True)
    var = ((x - mean) ** 2).mean(-1, keepdims=True)
    xn = (x - mean) / jnp.sqrt(var + EPS) * gamma + beta
    xc = jnp.transpose(xn, (0, 2, 1))                           # (B, D, T)
    dw = jax.lax.conv_general_dilated(
        xc, w_dw, window_strides=(1,), padding=[(pad, pad)],
        feature_group_count=x.shape[-1],
        dimension_numbers=('NCH', 'OIH', 'NCH'))
    dw = dw + b_dw[None, :, None]
    act = jnp.where(dw >= 0, dw, LRELU_SLOPE * dw)
    out = jax.lax.conv_general_dilated(
        act, w_out, window_strides=(1,), padding=[(0, 0)],
        dimension_numbers=('NCH', 'OIH', 'NCH'))
    out = out + b_out[None, :, None]
    return jnp.transpose(out, (0, 2, 1))


if __name__ == "__main__":
    B, T, D = 2, 72, 128      # T deliberately not a multiple of the time tile
    E, K = 4, 7

    key = jax.random.PRNGKey(0)
    ks = jax.random.split(key, 7)
    x = jax.random.normal(ks[0], (B, T, D), jnp.float32)
    gamma = 1.0 + 0.1 * jax.random.normal(ks[1], (D,), jnp.float32)
    beta = 0.1 * jax.random.normal(ks[2], (D,), jnp.float32)
    w_dw = 0.2 * jax.random.normal(ks[3], (D * E, 1, K), jnp.float32)
    b_dw = 0.1 * jax.random.normal(ks[4], (D * E,), jnp.float32)
    w_out = 0.2 * jax.random.normal(ks[5], (D, D * E, 1), jnp.float32)
    b_out = 0.1 * jax.random.normal(ks[6], (D,), jnp.float32)

    y_ref = reference(x, gamma, beta, w_dw, b_dw, w_out, b_out, kernel_size=K)

    # 1) exact-semantics f32 path, small tile -> multi-tile + ragged last tile.
    params_f32 = pack_params(gamma, beta, w_dw, b_dw, w_out, b_out,
                             kernel_size=K, expansion=E, use_bf16=False)
    y32 = jax.block_until_ready(depthwise_conv_module(x, params_f32, block_t=32))
    np.testing.assert_allclose(np.asarray(y32), np.asarray(y_ref),
                               atol=1e-4, rtol=1e-4)

    # 2) f32 path with the default (large) tile -> single-tile path.
    y32b = jax.block_until_ready(depthwise_conv_module(x, params_f32))
    np.testing.assert_allclose(np.asarray(y32b), np.asarray(y_ref),
                               atol=1e-4, rtol=1e-4)

    # 3) bf16 fast path (bf16 depthwise VPU + bf16 MXU, f32 accumulate).
    params_bf16 = pack_params(gamma, beta, w_dw, b_dw, w_out, b_out,
                              kernel_size=K, expansion=E, use_bf16=True)
    y16 = jax.block_until_ready(depthwise_conv_module(x, params_bf16, block_t=32))
    np.testing.assert_allclose(np.asarray(y16), np.asarray(y_ref),
                               atol=1e-1, rtol=1e-1)

    print("KERNEL_OK")
</pallas_src>

<mosaic_0001>
module attributes {stable_mosaic.version = 11 : i64} {
  func.func @_kernel(%arg0: memref<40x128xf32, #tpu.memory_space<vmem>>, %arg1: memref<40x128xf32, #tpu.memory_space<vmem>>) attributes {dimension_semantics = [], scalar_prefetch = 0 : i64, scratch_operands = 0 : i64, tpu.core_type = #tpu.core_type<tc>} {
    %c0 = arith.constant 0 : index
    %c0_0 = arith.constant 0 : index
    %0 = vector.load %arg0[%c0, %c0_0] : memref<40x128xf32, #tpu.memory_space<vmem>>, vector<40x128xf32>
    %c1_i32 = arith.constant 1 : i32
    %1 = tpu.dynamic_rotate %0 by %c1_i32 dim 0 : vector<40x128xf32>, i32 -> vector<40x128xf32>
    %c0_1 = arith.constant 0 : index
    %c0_2 = arith.constant 0 : index
    %2 = vector.load %arg1[%c0_1, %c0_2] : memref<40x128xf32, #tpu.memory_space<vmem>>, vector<40x128xf32>
    tpu.vector_store %arg1[%c0_1, %c0_2], %1 {strides = array<i32>} : memref<40x128xf32, #tpu.memory_space<vmem>>, vector<40x128xf32>,
    return
  }
}

module attributes {stable_mosaic.version = 11 : i64} {
  func.func @dwconv_kernel(%arg0: i32, %arg1: i32, %arg2: memref<1x32x128xf32, #tpu.memory_space<vmem>>, %arg3: memref<1x1x8x128xf32, #tpu.memory_space<vmem>>, %arg4: memref<1x128xf32, #tpu.memory_space<vmem>>, %arg5: memref<1x128xf32, #tpu.memory_space<vmem>>, %arg6: memref<4x7x128xf32, #tpu.memory_space<vmem>>, %arg7: memref<4x128xf32, #tpu.memory_space<vmem>>, %arg8: memref<4x128x128xf32, #tpu.memory_space<vmem>>, %arg9: memref<1x128xf32, #tpu.memory_space<vmem>>, %arg10: memref<1x32x128xf32, #tpu.memory_space<vmem>>) attributes {dimension_semantics = [#tpu.dimension_semantics<parallel>, #tpu.dimension_semantics<parallel>], iteration_bounds = array<i64: 2, 3>, scalar_prefetch = 0 : i64, scratch_operands = 0 : i64, tpu.core_type = #tpu.core_type<tc>, window_params = [{transform_indices = @transform_0, window_bounds = array<i64: 1, 32, 128>}, {transform_indices = @transform_1, window_bounds = array<i64: 1, 1, 8, 128>}, {pipeline_mode = #tpu.pipeline_mode<synchronous>, transform_indices = @transform_2, window_bounds = array<i64: 1, 128>}, {pipeline_mode = #tpu.pipeline_mode<synchronous>, transform_indices = @transform_3, window_bounds = array<i64: 1, 128>}, {pipeline_mode = #tpu.pipeline_mode<synchronous>, transform_indices = @transform_4, window_bounds = array<i64: 4, 7, 128>}, {pipeline_mode = #tpu.pipeline_mode<synchronous>, transform_indices = @transform_5, window_bounds = array<i64: 4, 128>}, {pipeline_mode = #tpu.pipeline_mode<synchronous>, transform_indices = @transform_6, window_bounds = array<i64: 4, 128, 128>}, {pipeline_mode = #tpu.pipeline_mode<synchronous>, transform_indices = @transform_7, window_bounds = array<i64: 1, 128>}, {transform_indices = @transform_8, window_bounds = array<i64: 1, 32, 128>}]} {
    %c0 = arith.constant 0 : index
    %c0_0 = arith.constant 0 : index
    %0 = vector.load %arg4[%c0, %c0_0] : memref<1x128xf32, #tpu.memory_space<vmem>>, vector<1x128xf32>
    %c0_1 = arith.constant 0 : index
    %c0_2 = arith.constant 0 : index
    %1 = vector.load %arg5[%c0_1, %c0_2] : memref<1x128xf32, #tpu.memory_space<vmem>>, vector<1x128xf32>
    %c0_3 = arith.constant 0 : index
    %c0_4 = arith.constant 0 : index
    %c0_5 = arith.constant 0 : index
    %2 = vector.load %arg2[%c0_3, %c0_4, %c0_5] : memref<1x32x128xf32, #tpu.memory_space<vmem>>, vector<1x32x128xf32>
    %3 = vector.shape_cast %2 : vector<1x32x128xf32> to vector<32x128xf32>
    %cst = arith.constant dense<0.000000e+00> : vector<32xf32>
    %4 = vector.multi_reduction <add>, %3, %cst [1] : vector<32x128xf32> to vector<32xf32>
    %5 = vector.shape_cast %4 : vector<32xf32> to vector<32x1xf32>
    %cst_6 = arith.constant 1.280000e+02 : f32
    %6 = vector.broadcast %cst_6 : f32 to vector<32x1xf32>
    %7 = arith.divf %5, %6 : vector<32x1xf32>
    %8 = vector.broadcast %7 : vector<32x1xf32> to vector<32x128xf32>
    %9 = arith.subf %3, %8 : vector<32x128xf32>
    %10 = arith.mulf %9, %9 : vector<32x128xf32>
    %cst_7 = arith.constant dense<0.000000e+00> : vector<32xf32>
    %11 = vector.multi_reduction <add>, %10, %cst_7 [1] : vector<32x128xf32> to vector<32xf32>
    %12 = vector.shape_cast %11 : vector<32xf32> to vector<32x1xf32>
    %cst_8 = arith.constant 1.280000e+02 : f32
    %13 = vector.broadcast %cst_8 : f32 to vector<32x1xf32>
    %14 = arith.divf %12, %13 : vector<32x1xf32>
    %cst_9 = arith.constant 9.99999974E-6 : f32
    %15 = vector.broadcast %cst_9 : f32 to vector<32x1xf32>
    %16 = arith.addf %14, %15 : vector<32x1xf32>
    %17 = math.rsqrt %16 : vector<32x1xf32>
    %18 = vector.broadcast %17 : vector<32x1xf32> to vector<32x128xf32>
    %19 = arith.mulf %9, %18 : vector<32x128xf32>
    %20 = vector.broadcast %0 : vector<1x128xf32> to vector<32x128xf32>
    %21 = arith.mulf %19, %20 : vector<32x128xf32>
    %22 = vector.broadcast %1 : vector<1x128xf32> to vector<32x128xf32>
    %23 = arith.addf %21, %22 : vector<32x128xf32>
    %c0_10 = arith.constant 0 : index
    %c0_11 = arith.constant 0 : index
    %c0_12 = arith.constant 0 : index
    %c0_13 = arith.constant 0 : index
    %24 = vector.load %arg3[%c0_10, %c0_11, %c0_12, %c0_13] : memref<1x1x8x128xf32, #tpu.memory_space<vmem>>, vector<1x1x8x128xf32>
    %25 = vector.shape_cast %24 : vector<1x1x8x128xf32> to vector<8x128xf32>
    %cst_14 = arith.constant dense<0.000000e+00> : vector<8xf32>
    %26 = vector.multi_reduction <add>, %25, %cst_14 [1] : vector<8x128xf32> to vector<8xf32>
    %27 = vector.shape_cast %26 : vector<8xf32> to vector<8x1xf32>
    %cst_15 = arith.constant 1.280000e+02 : f32
    %28 = vector.broadcast %cst_15 : f32 to vector<8x1xf32>
    %29 = arith.divf %27, %28 : vector<8x1xf32>
    %30 = vector.broadcast %29 : vector<8x1xf32> to vector<8x128xf32>
    %31 = arith.subf %25, %30 : vector<8x128xf32>
    %32 = arith.mulf %31, %31 : vector<8x128xf32>
    %cst_16 = arith.constant dense<0.000000e+00> : vector<8xf32>
    %33 = vector.multi_reduction <add>, %32, %cst_16 [1] : vector<8x128xf32> to vector<8xf32>
    %34 = vector.shape_cast %33 : vector<8xf32> to vector<8x1xf32>
    %cst_17 = arith.constant 1.280000e+02 : f32
    %35 = vector.broadcast %cst_17 : f32 to vector<8x1xf32>
    %36 = arith.divf %34, %35 : vector<8x1xf32>
    %cst_18 = arith.constant 9.99999974E-6 : f32
    %37 = vector.broadcast %cst_18 : f32 to vector<8x1xf32>
    %38 = arith.addf %36, %37 : vector<8x1xf32>
    %39 = math.rsqrt %38 : vector<8x1xf32>
    %40 = vector.broadcast %39 : vector<8x1xf32> to vector<8x128xf32>
    %41 = arith.mulf %31, %40 : vector<8x128xf32>
    %42 = vector.broadcast %0 : vector<1x128xf32> to vector<8x128xf32>
    %43 = arith.mulf %41, %42 : vector<8x128xf32>
    %44 = vector.broadcast %1 : vector<1x128xf32> to vector<8x128xf32>
    %45 = arith.addf %43, %44 : vector<8x128xf32>
    %c32_i32 = arith.constant 32 : i32
    %46 = arith.muli %arg1, %c32_i32 : i32
    %47 = tpu.iota {dimensions = array<i32: 0>} : vector<32x1xi32>
    %48 = vector.broadcast %46 : i32 to vector<32x1xi32>
    %49 = arith.addi %48, %47 : vector<32x1xi32>
    %c72_i32 = arith.constant 72 : i32
    %50 = vector.broadcast %c72_i32 : i32 to vector<32x1xi32>
    %51 = arith.cmpi slt, %49, %50 : vector<32x1xi32>
    %cst_19 = arith.constant 0.000000e+00 : f32
    %52 = vector.shape_cast %51 : vector<32x1xi1> to vector<32x1xi1>
    %53 = vector.broadcast %52 : vector<32x1xi1> to vector<32x128xi1>
    %54 = vector.broadcast %cst_19 : f32 to vector<32x128xf32>
    %55 = arith.select %53, %23, %54 : vector<32x128xi1>, vector<32x128xf32>
    %56 = tpu.iota {dimensions = array<i32: 0>} : vector<8x1xi32>
    %c3_i32 = arith.constant 3 : i32
    %57 = vector.broadcast %c3_i32 : i32 to vector<8x1xi32>
    %58 = arith.cmpi slt, %56, %57 : vector<8x1xi32>
    %c1_i32 = arith.constant 1 : i32
    %59 = arith.addi %arg1, %c1_i32 : i32
    %c32_i32_20 = arith.constant 32 : i32
    %60 = arith.muli %59, %c32_i32_20 : i32
    %61 = vector.broadcast %60 : i32 to vector<8x1xi32>
    %62 = arith.addi %61, %56 : vector<8x1xi32>
    %c32_i32_21 = arith.constant 32 : i32
    %63 = arith.muli %arg1, %c32_i32_21 : i32
    %64 = vector.broadcast %63 : i32 to vector<8x1xi32>
    %65 = arith.addi %64, %56 : vector<8x1xi32>
    %c8_i32 = arith.constant 8 : i32
    %66 = vector.broadcast %c8_i32 : i32 to vector<8x1xi32>
    %67 = arith.subi %65, %66 : vector<8x1xi32>
    %68 = arith.select %58, %62, %67 : vector<8x1xi1>, vector<8x1xi32>
    %c0_i32 = arith.constant 0 : i32
    %69 = vector.broadcast %c0_i32 : i32 to vector<8x1xi32>
    %70 = arith.cmpi sge, %68, %69 : vector<8x1xi32>
    %c72_i32_22 = arith.constant 72 : i32
    %71 = vector.broadcast %c72_i32_22 : i32 to vector<8x1xi32>
    %72 = arith.cmpi slt, %68, %71 : vector<8x1xi32>
    %73 = arith.andi %70, %72 : vector<8x1xi1>
    %cst_23 = arith.constant 0.000000e+00 : f32
    %74 = vector.shape_cast %73 : vector<8x1xi1> to vector<8x1xi1>
    %75 = vector.broadcast %74 : vector<8x1xi1> to vector<8x128xi1>
    %76 = vector.broadcast %cst_23 : f32 to vector<8x128xf32>
    %77 = arith.select %75, %45, %76 : vector<8x128xi1>, vector<8x128xf32>
    %78 = vector.extract_strided_slice %77 {offsets = [5, 0], sizes = [3, 128], strides = [1, 1]} : vector<8x128xf32> to vector<3x128xf32>
    %79 = vector.extract_strided_slice %77 {offsets = [0, 0], sizes = [3, 128], strides = [1, 1]} : vector<8x128xf32> to vector<3x128xf32>
    %80 = tpu.concatenate %78, %55, %79 in 0 : vector<3x128xf32>, vector<32x128xf32>, vector<3x128xf32> -> vector<38x128xf32>
    %81 = vector.extract_strided_slice %80 {offsets = [0, 0], sizes = [32, 128], strides = [1, 1]} : vector<38x128xf32> to vector<32x128xf32>
    %82 = vector.extract_strided_slice %80 {offsets = [1, 0], sizes = [32, 128], strides = [1, 1]} : vector<38x128xf32> to vector<32x128xf32>
    %83 = vector.extract_strided_slice %80 {offsets = [2, 0], sizes = [32, 128], strides = [1, 1]} : vector<38x128xf32> to vector<32x128xf32>
    %84 = vector.extract_strided_slice %80 {offsets = [3, 0], sizes = [32, 128], strides = [1, 1]} : vector<38x128xf32> to vector<32x128xf32>
    %85 = vector.extract_strided_slice %80 {offsets = [4, 0], sizes = [32, 128], strides = [1, 1]} : vector<38x128xf32> to vector<32x128xf32>
    %86 = vector.extract_strided_slice %80 {offsets = [5, 0], sizes = [32, 128], strides = [1, 1]} : vector<38x128xf32> to vector<32x128xf32>
    %87 = vector.extract_strided_slice %80 {offsets = [6, 0], sizes = [32, 128], strides = [1, 1]} : vector<38x128xf32> to vector<32x128xf32>
    %c0_24 = arith.constant 0 : index
    %c0_25 = arith.constant 0 : index
    %c0_26 = arith.constant 0 : index
    %88 = vector.load %arg6[%c0_24, %c0_25, %c0_26] : memref<4x7x128xf32, #tpu.memory_space<vmem>>, vector<4x7x128xf32>
    %c0_27 = arith.constant 0 : index
    %c0_28 = arith.constant 0 : index
    %89 = vector.load %arg7[%c0_27, %c0_28] : memref<4x128xf32, #tpu.memory_space<vmem>>, vector<4x128xf32>
    %90 = vector.extract_strided_slice %88 {offsets = [0, 0, 0], sizes = [1, 1, 128], strides = [1, 1, 1]} : vector<4x7x128xf32> to vector<1x1x128xf32>
    %91 = vector.shape_cast %90 : vector<1x1x128xf32> to vector<128xf32>
    %92 = vector.shape_cast %91 : vector<128xf32> to vector<1x128xf32>
    %93 = vector.broadcast %92 : vector<1x128xf32> to vector<32x128xf32>
    %94 = arith.mulf %81, %93 : vector<32x128xf32>
    %95 = vector.extract_strided_slice %88 {offsets = [0, 1, 0], sizes = [1, 1, 128], strides = [1, 1, 1]} : vector<4x7x128xf32> to vector<1x1x128xf32>
    %96 = vector.shape_cast %95 : vector<1x1x128xf32> to vector<128xf32>
    %97 = vector.shape_cast %96 : vector<128xf32> to vector<1x128xf32>
    %98 = vector.broadcast %97 : vector<1x128xf32> to vector<32x128xf32>
    %99 = arith.mulf %82, %98 : vector<32x128xf32>
    %100 = arith.addf %94, %99 : vector<32x128xf32>
    %101 = vector.extract_strided_slice %88 {offsets = [0, 2, 0], sizes = [1, 1, 128], strides = [1, 1, 1]} : vector<4x7x128xf32> to vector<1x1x128xf32>
    %102 = vector.shape_cast %101 : vector<1x1x128xf32> to vector<128xf32>
    %103 = vector.shape_cast %102 : vector<128xf32> to vector<1x128xf32>
    %104 = vector.broadcast %103 : vector<1x128xf32> to vector<32x128xf32>
    %105 = arith.mulf %83, %104 : vector<32x128xf32>
    %106 = arith.addf %100, %105 : vector<32x128xf32>
    %107 = vector.extract_strided_slice %88 {offsets = [0, 3, 0], sizes = [1, 1, 128], strides = [1, 1, 1]} : vector<4x7x128xf32> to vector<1x1x128xf32>
    %108 = vector.shape_cast %107 : vector<1x1x128xf32> to vector<128xf32>
    %109 = vector.shape_cast %108 : vector<128xf32> to vector<1x128xf32>
    %110 = vector.broadcast %109 : vector<1x128xf32> to vector<32x128xf32>
    %111 = arith.mulf %84, %110 : vector<32x128xf32>
    %112 = arith.addf %106, %111 : vector<32x128xf32>
    %113 = vector.extract_strided_slice %88 {offsets = [0, 4, 0], sizes = [1, 1, 128], strides = [1, 1, 1]} : vector<4x7x128xf32> to vector<1x1x128xf32>
    %114 = vector.shape_cast %113 : vector<1x1x128xf32> to vector<128xf32>
    %115 = vector.shape_cast %114 : vector<128xf32> to vector<1x128xf32>
    %116 = vector.broadcast %115 : vector<1x128xf32> to vector<32x128xf32>
    %117 = arith.mulf %85, %116 : vector<32x128xf32>
    %118 = arith.addf %112, %117 : vector<32x128xf32>
    %119 = vector.extract_strided_slice %88 {offsets = [0, 5, 0], sizes = [1, 1, 128], strides = [1, 1, 1]} : vector<4x7x128xf32> to vector<1x1x128xf32>
    %120 = vector.shape_cast %119 : vector<1x1x128xf32> to vector<128xf32>
    %121 = vector.shape_cast %120 : vector<128xf32> to vector<1x128xf32>
    %122 = vector.broadcast %121 : vector<1x128xf32> to vector<32x128xf32>
    %123 = arith.mulf %86, %122 : vector<32x128xf32>
    %124 = arith.addf %118, %123 : vector<32x128xf32>
    %125 = vector.extract_strided_slice %88 {offsets = [0, 6, 0], sizes = [1, 1, 128], strides = [1, 1, 1]} : vector<4x7x128xf32> to vector<1x1x128xf32>
    %126 = vector.shape_cast %125 : vector<1x1x128xf32> to vector<128xf32>
    %127 = vector.shape_cast %126 : vector<128xf32> to vector<1x128xf32>
    %128 = vector.broadcast %127 : vector<1x128xf32> to vector<32x128xf32>
    %129 = arith.mulf %87, %128 : vector<32x128xf32>
    %130 = arith.addf %124, %129 : vector<32x128xf32>
    %131 = vector.extract_strided_slice %89 {offsets = [0, 0], sizes = [1, 128], strides = [1, 1]} : vector<4x128xf32> to vector<1x128xf32>
    %132 = vector.shape_cast %131 : vector<1x128xf32> to vector<128xf32>
    %133 = vector.shape_cast %132 : vector<128xf32> to vector<1x128xf32>
    %134 = vector.broadcast %133 : vector<1x128xf32> to vector<32x128xf32>
    %135 = arith.addf %130, %134 : vector<32x128xf32>
    %cst_29 = arith.constant 3.000000e-01 : f32
    %136 = vector.broadcast %cst_29 : f32 to vector<32x128xf32>
    %137 = arith.mulf %136, %135 : vector<32x128xf32>
    %138 = arith.maximumf %135, %137 : vector<32x128xf32>
    %c0_30 = arith.constant 0 : index
    %c0_31 = arith.constant 0 : index
    %c0_32 = arith.constant 0 : index
    %139 = vector.load %arg8[%c0_30, %c0_31, %c0_32] : memref<4x128x128xf32, #tpu.memory_space<vmem>>, vector<1x128x128xf32>
    %140 = vector.shape_cast %139 : vector<1x128x128xf32> to vector<128x128xf32>
    %cst_33 = arith.constant dense<0.000000e+00> : vector<32x128xf32>
    %141 = tpu.matmul %138, %140, %cst_33 {dimension_numbers = #tpu.dot_dimension_numbers<[1], [0], [0], [1], [0, 0, 1, 1], [], []>} : vector<32x128xf32>, vector<128x128xf32>, vector<32x128xf32> -> vector<32x128xf32>
    %142 = vector.extract_strided_slice %88 {offsets = [1, 0, 0], sizes = [1, 1, 128], strides = [1, 1, 1]} : vector<4x7x128xf32> to vector<1x1x128xf32>
    %143 = vector.shape_cast %142 : vector<1x1x128xf32> to vector<128xf32>
    %144 = vector.shape_cast %143 : vector<128xf32> to vector<1x128xf32>
    %145 = vector.broadcast %144 : vector<1x128xf32> to vector<32x128xf32>
    %146 = arith.mulf %81, %145 : vector<32x128xf32>
    %147 = vector.extract_strided_slice %88 {offsets = [1, 1, 0], sizes = [1, 1, 128], strides = [1, 1, 1]} : vector<4x7x128xf32> to vector<1x1x128xf32>
    %148 = vector.shape_cast %147 : vector<1x1x128xf32> to vector<128xf32>
    %149 = vector.shape_cast %148 : vector<128xf32> to vector<1x128xf32>
    %150 = vector.broadcast %149 : vector<1x128xf32> to vector<32x128xf32>
    %151 = arith.mulf %82, %150 : vector<32x128xf32>
    %152 = arith.addf %146, %151 : vector<32x128xf32>
    %153 = vector.extract_strided_slice %88 {offsets = [1, 2, 0], sizes = [1, 1, 128], strides = [1, 1, 1]} : vector<4x7x128xf32> to vector<1x1x128xf32>
    %154 = vector.shape_cast %153 : vector<1x1x128xf32> to vector<128xf32>
    %155 = vector.shape_cast %154 : vector<128xf32> to vector<1x128xf32>
    %156 = vector.broadcast %155 : vector<1x128xf32> to vector<32x128xf32>
    %157 = arith.mulf %83, %156 : vector<32x128xf32>
    %158 = arith.addf %152, %157 : vector<32x128xf32>
    %159 = vector.extract_strided_slice %88 {offsets = [1, 3, 0], sizes = [1, 1, 128], strides = [1, 1, 1]} : vector<4x7x128xf32> to vector<1x1x128xf32>
    %160 = vector.shape_cast %159 : vector<1x1x128xf32> to vector<128xf32>
    %161 = vector.shape_cast %160 : vector<128xf32> to vector<1x128xf32>
    %162 = vector.broadcast %161 : vector<1x128xf32> to vector<32x128xf32>
    %163 = arith.mulf %84, %162 : vector<32x128xf32>
    %164 = arith.addf %158, %163 : vector<32x128xf32>
    %165 = vector.extract_strided_slice %88 {offsets = [1, 4, 0], sizes = [1, 1, 128], strides = [1, 1, 1]} : vector<4x7x128xf32> to vector<1x1x128xf32>
    %166 = vector.shape_cast %165 : vector<1x1x128xf32> to vector<128xf32>
    %167 = vector.shape_cast %166 : vector<128xf32> to vector<1x128xf32>
    %168 = vector.broadcast %167 : vector<1x128xf32> to vector<32x128xf32>
    %169 = arith.mulf %85, %168 : vector<32x128xf32>
    %170 = arith.addf %164, %169 : vector<32x128xf32>
    %171 = vector.extract_strided_slice %88 {offsets = [1, 5, 0], sizes = [1, 1, 128], strides = [1, 1, 1]} : vector<4x7x128xf32> to vector<1x1x128xf32>
    %172 = vector.shape_cast %171 : vector<1x1x128xf32> to vector<128xf32>
    %173 = vector.shape_cast %172 : vector<128xf32> to vector<1x128xf32>
    %174 = vector.broadcast %173 : vector<1x128xf32> to vector<32x128xf32>
    %175 = arith.mulf %86, %174 : vector<32x128xf32>
    %176 = arith.addf %170, %175 : vector<32x128xf32>
    %177 = vector.extract_strided_slice %88 {offsets = [1, 6, 0], sizes = [1, 1, 128], strides = [1, 1, 1]} : vector<4x7x128xf32> to vector<1x1x128xf32>
    %178 = vector.shape_cast %177 : vector<1x1x128xf32> to vector<128xf32>
    %179 = vector.shape_cast %178 : vector<128xf32> to vector<1x128xf32>
    %180 = vector.broadcast %179 : vector<1x128xf32> to vector<32x128xf32>
    %181 = arith.mulf %87, %180 : vector<32x128xf32>
    %182 = arith.addf %176, %181 : vector<32x128xf32>
    %183 = vector.extract_strided_slice %89 {offsets = [1, 0], sizes = [1, 128], strides = [1, 1]} : vector<4x128xf32> to vector<1x128xf32>
    %184 = vector.shape_cast %183 : vector<1x128xf32> to vector<128xf32>
    %185 = vector.shape_cast %184 : vector<128xf32> to vector<1x128xf32>
    %186 = vector.broadcast %185 : vector<1x128xf32> to vector<32x128xf32>
    %187 = arith.addf %182, %186 : vector<32x128xf32>
    %cst_34 = arith.constant 3.000000e-01 : f32
    %188 = vector.broadcast %cst_34 : f32 to vector<32x128xf32>
    %189 = arith.mulf %188, %187 : vector<32x128xf32>
    %190 = arith.maximumf %187, %189 : vector<32x128xf32>
    %c1 = arith.constant 1 : index
    %c0_35 = arith.constant 0 : index
    %c0_36 = arith.constant 0 : index
    %191 = vector.load %arg8[%c1, %c0_35, %c0_36] : memref<4x128x128xf32, #tpu.memory_space<vmem>>, vector<1x128x128xf32>
    %192 = vector.shape_cast %191 : vector<1x128x128xf32> to vector<128x128xf32>
    %cst_37 = arith.constant dense<0.000000e+00> : vector<32x128xf32>
    %193 = tpu.matmul %190, %192, %cst_37 {dimension_numbers = #tpu.dot_dimension_numbers<[1], [0], [0], [1], [0, 0, 1, 1], [], []>} : vector<32x128xf32>, vector<128x128xf32>, vector<32x128xf32> -> vector<32x128xf32>
    %194 = arith.addf %141, %193 : vector<32x128xf32>
    %195 = vector.extract_strided_slice %88 {offsets = [2, 0, 0], sizes = [1, 1, 128], strides = [1, 1, 1]} : vector<4x7x128xf32> to vector<1x1x128xf32>
    %196 = vector.shape_cast %195 : vector<1x1x128xf32> to vector<128xf32>
    %197 = vector.shape_cast %196 : vector<128xf32> to vector<1x128xf32>
    %198 = vector.broadcast %197 : vector<1x128xf32> to vector<32x128xf32>
    %199 = arith.mulf %81, %198 : vector<32x128xf32>
    %200 = vector.extract_strided_slice %88 {offsets = [2, 1, 0], sizes = [1, 1, 128], strides = [1, 1, 1]} : vector<4x7x128xf32> to vector<1x1x128xf32>
    %201 = vector.shape_cast %200 : vector<1x1x128xf32> to vector<128xf32>
    %202 = vector.shape_cast %201 : vector<128xf32> to vector<1x128xf32>
    %203 = vector.broadcast %202 : vector<1x128xf32> to vector<32x128xf32>
    %204 = arith.mulf %82, %203 : vector<32x128xf32>
    %205 = arith.addf %199, %204 : vector<32x128xf32>
    %206 = vector.extract_strided_slice %88 {offsets = [2, 2, 0], sizes = [1, 1, 128], strides = [1, 1, 1]} : vector<4x7x128xf32> to vector<1x1x128xf32>
    %207 = vector.shape_cast %206 : vector<1x1x128xf32> to vector<128xf32>
    %208 = vector.shape_cast %207 : vector<128xf32> to vector<1x128xf32>
    %209 = vector.broadcast %208 : vector<1x128xf32> to vector<32x128xf32>
    %210 = arith.mulf %83, %209 : vector<32x128xf32>
    %211 = arith.addf %205, %210 : vector<32x128xf32>
    %212 = vector.extract_strided_slice %88 {offsets = [2, 3, 0], sizes = [1, 1, 128], strides = [1, 1, 1]} : vector<4x7x128xf32> to vector<1x1x128xf32>
    %213 = vector.shape_cast %212 : vector<1x1x128xf32> to vector<128xf32>
    %214 = vector.shape_cast %213 : vector<128xf32> to vector<1x128xf32>
    %215 = vector.broadcast %214 : vector<1x128xf32> to vector<32x128xf32>
    %216 = arith.mulf %84, %215 : vector<32x128xf32>
    %217 = arith.addf %211, %216 : vector<32x128xf32>
    %218 = vector.extract_strided_slice %88 {offsets = [2, 4, 0], sizes = [1, 1, 128], strides = [1, 1, 1]} : vector<4x7x128xf32> to vector<1x1x128xf32>
    %219 = vector.shape_cast %218 : vector<1x1x128xf32> to vector<128xf32>
    %220 = vector.shape_cast %219 : vector<128xf32> to vector<1x128xf32>
    %221 = vector.broadcast %220 : vector<1x128xf32> to vector<32x128xf32>
    %222 = arith.mulf %85, %221 : vector<32x128xf32>
    %223 = arith.addf %217, %222 : vector<32x128xf32>
    %224 = vector.extract_strided_slice %88 {offsets = [2, 5, 0], sizes = [1, 1, 128], strides = [1, 1, 1]} : vector<4x7x128xf32> to vector<1x1x128xf32>
    %225 = vector.shape_cast %224 : vector<1x1x128xf32> to vector<128xf32>
    %226 = vector.shape_cast %225 : vector<128xf32> to vector<1x128xf32>
    %227 = vector.broadcast %226 : vector<1x128xf32> to vector<32x128xf32>
    %228 = arith.mulf %86, %227 : vector<32x128xf32>
    %229 = arith.addf %223, %228 : vector<32x128xf32>
    %230 = vector.extract_strided_slice %88 {offsets = [2, 6, 0], sizes = [1, 1, 128], strides = [1, 1, 1]} : vector<4x7x128xf32> to vector<1x1x128xf32>
    %231 = vector.shape_cast %230 : vector<1x1x128xf32> to vector<128xf32>
    %232 = vector.shape_cast %231 : vector<128xf32> to vector<1x128xf32>
    %233 = vector.broadcast %232 : vector<1x128xf32> to vector<32x128xf32>
    %234 = arith.mulf %87, %233 : vector<32x128xf32>
    %235 = arith.addf %229, %234 : vector<32x128xf32>
    %236 = vector.extract_strided_slice %89 {offsets = [2, 0], sizes = [1, 128], strides = [1, 1]} : vector<4x128xf32> to vector<1x128xf32>
    %237 = vector.shape_cast %236 : vector<1x128xf32> to vector<128xf32>
    %238 = vector.shape_cast %237 : vector<128xf32> to vector<1x128xf32>
    %239 = vector.broadcast %238 : vector<1x128xf32> to vector<32x128xf32>
    %240 = arith.addf %235, %239 : vector<32x128xf32>
    %cst_38 = arith.constant 3.000000e-01 : f32
    %241 = vector.broadcast %cst_38 : f32 to vector<32x128xf32>
    %242 = arith.mulf %241, %240 : vector<32x128xf32>
    %243 = arith.maximumf %240, %242 : vector<32x128xf32>
    %c2 = arith.constant 2 : index
    %c0_39 = arith.constant 0 : index
    %c0_40 = arith.constant 0 : index
    %244 = vector.load %arg8[%c2, %c0_39, %c0_40] : memref<4x128x128xf32, #tpu.memory_space<vmem>>, vector<1x128x128xf32>
    %245 = vector.shape_cast %244 : vector<1x128x128xf32> to vector<128x128xf32>
    %cst_41 = arith.constant dense<0.000000e+00> : vector<32x128xf32>
    %246 = tpu.matmul %243, %245, %cst_41 {dimension_numbers = #tpu.dot_dimension_numbers<[1], [0], [0], [1], [0, 0, 1, 1], [], []>} : vector<32x128xf32>, vector<128x128xf32>, vector<32x128xf32> -> vector<32x128xf32>
    %247 = arith.addf %194, %246 : vector<32x128xf32>
    %248 = vector.extract_strided_slice %88 {offsets = [3, 0, 0], sizes = [1, 1, 128], strides = [1, 1, 1]} : vector<4x7x128xf32> to vector<1x1x128xf32>
    %249 = vector.shape_cast %248 : vector<1x1x128xf32> to vector<128xf32>
    %250 = vector.shape_cast %249 : vector<128xf32> to vector<1x128xf32>
    %251 = vector.broadcast %250 : vector<1x128xf32> to vector<32x128xf32>
    %252 = arith.mulf %81, %251 : vector<32x128xf32>
    %253 = vector.extract_strided_slice %88 {offsets = [3, 1, 0], sizes = [1, 1, 128], strides = [1, 1, 1]} : vector<4x7x128xf32> to vector<1x1x128xf32>
    %254 = vector.shape_cast %253 : vector<1x1x128xf32> to vector<128xf32>
    %255 = vector.shape_cast %254 : vector<128xf32> to vector<1x128xf32>
    %256 = vector.broadcast %255 : vector<1x128xf32> to vector<32x128xf32>
    %257 = arith.mulf %82, %256 : vector<32x128xf32>
    %258 = arith.addf %252, %257 : vector<32x128xf32>
    %259 = vector.extract_strided_slice %88 {offsets = [3, 2, 0], sizes = [1, 1, 128], strides = [1, 1, 1]} : vector<4x7x128xf32> to vector<1x1x128xf32>
    %260 = vector.shape_cast %259 : vector<1x1x128xf32> to vector<128xf32>
    %261 = vector.shape_cast %260 : vector<128xf32> to vector<1x128xf32>
    %262 = vector.broadcast %261 : vector<1x128xf32> to vector<32x128xf32>
    %263 = arith.mulf %83, %262 : vector<32x128xf32>
    %264 = arith.addf %258, %263 : vector<32x128xf32>
    %265 = vector.extract_strided_slice %88 {offsets = [3, 3, 0], sizes = [1, 1, 128], strides = [1, 1, 1]} : vector<4x7x128xf32> to vector<1x1x128xf32>
    %266 = vector.shape_cast %265 : vector<1x1x128xf32> to vector<128xf32>
    %267 = vector.shape_cast %266 : vector<128xf32> to vector<1x128xf32>
    %268 = vector.broadcast %267 : vector<1x128xf32> to vector<32x128xf32>
    %269 = arith.mulf %84, %268 : vector<32x128xf32>
    %270 = arith.addf %264, %269 : vector<32x128xf32>
    %271 = vector.extract_strided_slice %88 {offsets = [3, 4, 0], sizes = [1, 1, 128], strides = [1, 1, 1]} : vector<4x7x128xf32> to vector<1x1x128xf32>
    %272 = vector.shape_cast %271 : vector<1x1x128xf32> to vector<128xf32>
    %273 = vector.shape_cast %272 : vector<128xf32> to vector<1x128xf32>
    %274 = vector.broadcast %273 : vector<1x128xf32> to vector<32x128xf32>
    %275 = arith.mulf %85, %274 : vector<32x128xf32>
    %276 = arith.addf %270, %275 : vector<32x128xf32>
    %277 = vector.extract_strided_slice %88 {offsets = [3, 5, 0], sizes = [1, 1, 128], strides = [1, 1, 1]} : vector<4x7x128xf32> to vector<1x1x128xf32>
    %278 = vector.shape_cast %277 : vector<1x1x128xf32> to vector<128xf32>
    %279 = vector.shape_cast %278 : vector<128xf32> to vector<1x128xf32>
    %280 = vector.broadcast %279 : vector<1x128xf32> to vector<32x128xf32>
    %281 = arith.mulf %86, %280 : vector<32x128xf32>
    %282 = arith.addf %276, %281 : vector<32x128xf32>
    %283 = vector.extract_strided_slice %88 {offsets = [3, 6, 0], sizes = [1, 1, 128], strides = [1, 1, 1]} : vector<4x7x128xf32> to vector<1x1x128xf32>
    %284 = vector.shape_cast %283 : vector<1x1x128xf32> to vector<128xf32>
    %285 = vector.shape_cast %284 : vector<128xf32> to vector<1x128xf32>
    %286 = vector.broadcast %285 : vector<1x128xf32> to vector<32x128xf32>
    %287 = arith.mulf %87, %286 : vector<32x128xf32>
    %288 = arith.addf %282, %287 : vector<32x128xf32>
    %289 = vector.extract_strided_slice %89 {offsets = [3, 0], sizes = [1, 128], strides = [1, 1]} : vector<4x128xf32> to vector<1x128xf32>
    %290 = vector.shape_cast %289 : vector<1x128xf32> to vector<128xf32>
    %291 = vector.shape_cast %290 : vector<128xf32> to vector<1x128xf32>
    %292 = vector.broadcast %291 : vector<1x128xf32> to vector<32x128xf32>
    %293 = arith.addf %288, %292 : vector<32x128xf32>
    %cst_42 = arith.constant 3.000000e-01 : f32
    %294 = vector.broadcast %cst_42 : f32 to vector<32x128xf32>
    %295 = arith.mulf %294, %293 : vector<32x128xf32>
    %296 = arith.maximumf %293, %295 : vector<32x128xf32>
    %c3 = arith.constant 3 : index
    %c0_43 = arith.constant 0 : index
    %c0_44 = arith.constant 0 : index
    %297 = vector.load %arg8[%c3, %c0_43, %c0_44] : memref<4x128x128xf32, #tpu.memory_space<vmem>>, vector<1x128x128xf32>
    %298 = vector.shape_cast %297 : vector<1x128x128xf32> to vector<128x128xf32>
    %cst_45 = arith.constant dense<0.000000e+00> : vector<32x128xf32>
    %299 = tpu.matmul %296, %298, %cst_45 {dimension_numbers = #tpu.dot_dimension_numbers<[1], [0], [0], [1], [0, 0, 1, 1], [], []>} : vector<32x128xf32>, vector<128x128xf32>, vector<32x128xf32> -> vector<32x128xf32>
    %300 = arith.addf %247, %299 : vector<32x128xf32>
    %c0_46 = arith.constant 0 : index
    %c0_47 = arith.constant 0 : index
    %301 = vector.load %arg9[%c0_46, %c0_47] : memref<1x128xf32, #tpu.memory_space<vmem>>, vector<1x128xf32>
    %302 = vector.broadcast %301 : vector<1x128xf32> to vector<32x128xf32>
    %303 = arith.addf %300, %302 : vector<32x128xf32>
    %c0_48 = arith.constant 0 : index
    %c0_49 = arith.constant 0 : index
    %c0_50 = arith.constant 0 : index
    %304 = vector.load %arg10[%c0_48, %c0_49, %c0_50] : memref<1x32x128xf32, #tpu.memory_space<vmem>>, vector<1x32x128xf32>
    %305 = vector.shape_cast %304 : vector<1x32x128xf32> to vector<32x128xf32>
    %306 = vector.shape_cast %303 : vector<32x128xf32> to vector<1x32x128xf32>
    tpu.vector_store %arg10[%c0_48, %c0_49, %c0_50], %306 {strides = array<i32>} : memref<1x32x128xf32, #tpu.memory_space<vmem>>, vector<1x32x128xf32>,
    return
  }
  func.func @transform_0(%arg0: i32, %arg1: i32) -> (i32, i32, i32) {
    %c0_i32 = arith.constant 0 : i32
    %c0_i32_0 = arith.constant 0 : i32
    return %arg0, %arg1, %c0_i32 : i32, i32, i32
  }
  func.func @transform_1(%arg0: i32, %arg1: i32) -> (i32, i32, i32, i32) {
    %c0_i32 = arith.constant 0 : i32
    %c0_i32_0 = arith.constant 0 : i32
    %c0_i32_1 = arith.constant 0 : i32
    return %arg0, %arg1, %c0_i32, %c0_i32_0 : i32, i32, i32, i32
  }
  func.func @transform_2(%arg0: i32, %arg1: i32) -> (i32, i32) {
    %c0_i32 = arith.constant 0 : i32
    %c0_i32_0 = arith.constant 0 : i32
    %c0_i32_1 = arith.constant 0 : i32
    return %c0_i32, %c0_i32_0 : i32, i32
  }
  func.func @transform_3(%arg0: i32, %arg1: i32) -> (i32, i32) {
    %c0_i32 = arith.constant 0 : i32
    %c0_i32_0 = arith.constant 0 : i32
    %c0_i32_1 = arith.constant 0 : i32
    return %c0_i32, %c0_i32_0 : i32, i32
  }
  func.func @transform_4(%arg0: i32, %arg1: i32) -> (i32, i32, i32) {
    %c0_i32 = arith.constant 0 : i32
    %c0_i32_0 = arith.constant 0 : i32
    %c0_i32_1 = arith.constant 0 : i32
    %c0_i32_2 = arith.constant 0 : i32
    return %c0_i32, %c0_i32_0, %c0_i32_1 : i32, i32, i32
  }
  func.func @transform_5(%arg0: i32, %arg1: i32) -> (i32, i32) {
    %c0_i32 = arith.constant 0 : i32
    %c0_i32_0 = arith.constant 0 : i32
    %c0_i32_1 = arith.constant 0 : i32
    return %c0_i32, %c0_i32_0 : i32, i32
  }
  func.func @transform_6(%arg0: i32, %arg1: i32) -> (i32, i32, i32) {
    %c0_i32 = arith.constant 0 : i32
    %c0_i32_0 = arith.constant 0 : i32
    %c0_i32_1 = arith.constant 0 : i32
    %c0_i32_2 = arith.constant 0 : i32
    return %c0_i32, %c0_i32_0, %c0_i32_1 : i32, i32, i32
  }
  func.func @transform_7(%arg0: i32, %arg1: i32) -> (i32, i32) {
    %c0_i32 = arith.constant 0 : i32
    %c0_i32_0 = arith.constant 0 : i32
    %c0_i32_1 = arith.constant 0 : i32
    return %c0_i32, %c0_i32_0 : i32, i32
  }
  func.func @transform_8(%arg0: i32, %arg1: i32) -> (i32, i32, i32) {
    %c0_i32 = arith.constant 0 : i32
    %c0_i32_0 = arith.constant 0 : i32
    return %arg0, %arg1, %c0_i32 : i32, i32, i32
  }
}

</mosaic_0001>

<llo_original>
// kernel: tpu_custom_call.1
$region0: #{tpu_custom_call.1}
  #allocation0 [shape = 'u32[]', space=smem, size = 0x4, offset = 0x4, fixed_abs, tag = 'smem constant byte address 0x4 - core index']
  #allocation1 [shape = 'u32[144,128]{1,0:T(1,128)}', space=vmem, size = 0x12000, scoped, tag = 'internal scratch']
  %s0 = inlined_call_operand.hbm [shape: f32[40,128], index: 0, kind: input, shape index: {}]
  %s1 = inlined_call_operand.hbm [shape: f32[40,128], index: 1, kind: output, shape index: {}]
  %s2 = sld [smem:[#allocation0]]
  $region18: #{tpu_custom_call.1} parent=0
    _
  %s4 = ssub.s32 1, %s2
  %s5 = scalar_select 0, %s4, %s2
  $region1: #{tpu_custom_call.1} parent=0
    #allocation2 [shape = 'u8[20480]{0}', space=vmem, size = 0x5000, scoped, tag = 'input window, operand 0, single buffered']
    #allocation3 [shape = 's32[1]{0}', space=sflag, size = 0x4, scoped, tag = 'scoped memory for tpu_custom_call.1']
    #allocation4 [shape = 's32[1]{0}', space=sflag, size = 0x4, scoped, tag = 'scoped memory for tpu_custom_call.1']
    #allocation5 [shape = 'u8[20480]{0}', space=vmem, size = 0x5000, scoped, tag = 'output window, operand 0, single buffered']
    %6 = vsyncpa [#allocation3], 0
    %7 = vsyncpa [#allocation4], 0
    // Predicated region
    $region2: #{tpu_custom_call.1} parent=1 // pred_check
      _
    $region3: #{tpu_custom_call.1} parent=1 // pred_check_branch
      %9 = sbr.rel (0) target = $region5
    $region4: #{tpu_custom_call.1} parent=1 // pred_region
      %s11 = ssub.s32 640, 640
      %12 = vsyncadd [#allocation3], %s11
      %s13 = sshll.u32 [#allocation2], 4
      %s14 = int_to_ptr.vmem [resolvable:$true] %s13
      %19 = dma.hbm_to_vmem [thread:$0]  %s0, 640, %s14, [#allocation3], 128, 128, 8
    $region5: #{tpu_custom_call.1} parent=1 // pred_fallthru
      _
    // Predicated region
    $region6: #{tpu_custom_call.1} parent=1 // pred_check
      _
    $region7: #{tpu_custom_call.1} parent=1 // pred_check_branch
      %21 = sbr.rel (0) target = $region9
    $region8: #{tpu_custom_call.1} parent=1 // pred_region
      %22 = dma.done [#allocation3], 640
    $region9: #{tpu_custom_call.1} parent=1 // pred_fallthru
      _
    %v23 = vld [vmem:[#allocation2] sm:$0xff]
    %v24 = vld [vmem:[#allocation2 + $0x8] sm:$0xff]
    %v25 = vld [vmem:[#allocation2 + $0x10] sm:$0xff]
    %v26 = vld [vmem:[#allocation2 + $0x18] sm:$0xff]
    %v27 = vld [vmem:[#allocation2 + $0x20] sm:$0xff]
    %v28 = vrot.slane %v23, 7
    %v29 = vrot.slane %v24, 7
    %v30 = vrot.slane %v25, 7
    %v31 = vrot.slane %v26, 7
    %v32 = vrot.slane %v27, 7
    %v33 = vlaneseq
    %v34 = vshrl.u32 %v33, 7
    %vm35 = vcmp.lt.s32.totalorder %v34, 1
    %v36 = vsel %vm35, %v31, %v32
    %v37 = vsel %vm35, %v30, %v31
    %v38 = vsel %vm35, %v29, %v30
    %v39 = vsel %vm35, %v28, %v29
    %v40 = vsel %vm35, %v32, %v28
    %41 = vst [vmem:[#allocation5] sm:$0xff] %v40
    %42 = vst [vmem:[#allocation5 + $0x8] sm:$0xff] %v39
    %43 = vst [vmem:[#allocation5 + $0x10] sm:$0xff] %v38
    %44 = vst [vmem:[#allocation5 + $0x18] sm:$0xff] %v37
    %45 = vst [vmem:[#allocation5 + $0x20] sm:$0xff] %v36
    // Predicated region
    $region10: #{tpu_custom_call.1} parent=1 // pred_check
      _
    $region11: #{tpu_custom_call.1} parent=1 // pred_check_branch
      %47 = sbr.rel (0) target = $region13
    $region12: #{tpu_custom_call.1} parent=1 // pred_region
      %s49 = ssub.s32 640, 640
      %50 = vsyncadd [#allocation4], %s49
      %s51 = sshll.u32 [#allocation5], 4
      %s52 = int_to_ptr.vmem [resolvable:$true] %s51
      %57 = dma.vmem_to_hbm [thread:$0]  %s52, 640, %s1, [#allocation4], 128, 128, 8
    $region13: #{tpu_custom_call.1} parent=1 // pred_fallthru
      _
    // Predicated region
    $region14: #{tpu_custom_call.1} parent=1 // pred_check
      _
    $region15: #{tpu_custom_call.1} parent=1 // pred_check_branch
      %59 = sbr.rel (0) target = $region17
    $region16: #{tpu_custom_call.1} parent=1 // pred_region
      %60 = dma.done [#allocation4], 640
    $region17: #{tpu_custom_call.1} parent=1 // pred_fallthru
      _
    %61 = vsyncpa [#allocation3], 1
    %62 = vsyncpa [#allocation4], 1

// kernel: tpu_custom_call.1
$region0: #{tpu_custom_call.1}
  #allocation0 [shape = 'u32[]', space=smem, size = 0x4, offset = 0x4, fixed_abs, tag = 'smem constant byte address 0x4 - core index']
  #allocation1 [shape = 'u32[144,128]{1,0:T(1,128)}', space=vmem, size = 0x12000, scoped, tag = 'internal scratch']
  %s0 = inlined_call_operand.hbm [shape: f32[2,72,128], index: 0, kind: input, shape index: {}]
  %s1 = inlined_call_operand.vmem [shape: f32[2,3,8,128], index: 1, kind: input, shape index: {}]
  %s2 = inlined_call_operand.vmem [shape: f32[1,128], index: 2, kind: input, shape index: {}]
  %s3 = inlined_call_operand.vmem [shape: f32[1,128], index: 3, kind: input, shape index: {}]
  %s4 = inlined_call_operand.vmem [shape: f32[4,7,128], index: 4, kind: input, shape index: {}]
  %s5 = inlined_call_operand.vmem [shape: f32[4,128], index: 5, kind: input, shape index: {}]
  %s6 = inlined_call_operand.hbm [shape: f32[4,128,128], index: 6, kind: input, shape index: {}]
  %s7 = inlined_call_operand.vmem [shape: f32[1,128], index: 7, kind: input, shape index: {}]
  %s8 = inlined_call_operand.hbm [shape: f32[2,72,128], index: 8, kind: output, shape index: {}]
  %s9 = sld [smem:[#allocation0]]
  $region73: #{tpu_custom_call.1} parent=0
    _
  %s11 = ssub.s32 1, %s9
  %s12 = scalar_select 0, %s11, %s9
  $region1: #{tpu_custom_call.1} parent=0
    #allocation2 [shape = 'u8[32768]{0}', space=vmem, size = 0x8000, scoped, tag = 'input window, operand 0']
    #allocation3 [shape = 's32[2]{0}', space=sflag, size = 0x8, scoped, tag = 'scoped memory for tpu_custom_call.1']
    #allocation4 [shape = 's32[2]{0}', space=sflag, size = 0x8, scoped, tag = 'scoped memory for tpu_custom_call.1']
    #allocation5 [shape = 'u8[262144]{0}', space=vmem, size = 0x40000, scoped, tag = 'input window, operand 6, single buffered']
    #allocation6 [shape = 's32[1]{0}', space=sflag, size = 0x4, scoped, tag = 'scoped memory for tpu_custom_call.1']
    #allocation7 [shape = 'u8[32768]{0}', space=vmem, size = 0x8000, scoped, tag = 'output window, operand 0']
    %13 = vsyncpa [#allocation3], 0
    %s14 = scalar_lea.sflag [#allocation3], 1
    %15 = vsyncpa %s14, 0
    %16 = vsyncpa [#allocation6], 0
    %17 = vsyncpa [#allocation4], 0
    %s18 = scalar_lea.sflag [#allocation4], 1
    %19 = vsyncpa %s18, 0
    loop: start=0, step=1, limit=8
    $region2: #{tpu_custom_call.1} parent=1 // loop_pre_header
      _
    $region3: #{tpu_custom_call.1} parent=1 // loop_header
      %s21 = sphi 0, %s25
      %p22 = scmp.ge.s32.totalorder %s21, 8
      %s28 = sphi 0, %s40
      %s29 = sphi 0, %s36
      %s30 = sphi 0, %s28
      %s31 = sphi 0, %s29
      %s32 = sphi 0, %s30
      %s33 = sphi 0, %s31
      %s45 = sphi 0, %s47
      %s48 = sphi 0, %s45
      %s49 = sphi 0, %s48
      %s65 = sphi 0, %s49
      %s73 = sphi 0, %s75
      %s76 = sphi 0, %s73
      %s77 = sphi 0, %s76
      %s93 = sphi 0, %s77
      %s97 = sphi 0, %s97
      %s99 = sphi 0, %s97
      %s100 = sphi 0, %s99
      %s114 = sphi 0, %s100
      %s118 = sphi 0, %s118
      %s120 = sphi 0, %s118
      %s121 = sphi 0, %s120
      %s135 = sphi 0, %s121
      %s139 = sphi 0, %s139
      %s141 = sphi 0, %s139
      %s142 = sphi 0, %s141
      %s156 = sphi 0, %s142
      %s160 = sphi 0, %s160
      %s162 = sphi 0, %s160
      %s163 = sphi 0, %s162
      %s177 = sphi 0, %s163
      %s181 = sphi 0, %s181
      %s183 = sphi 0, %s181
      %s184 = sphi 0, %s183
      %s198 = sphi 0, %s184
      %s202 = sphi 0, %s202
      %s204 = sphi 0, %s202
      %s205 = sphi 0, %s204
      %s219 = sphi 0, %s205
      %s227 = sphi 0, %s229
      %s230 = sphi 0, %s227
      %s231 = sphi 0, %s230
      %s247 = sphi 0, %s231
    $region4: #{tpu_custom_call.1} parent=1 // loop_header_branch
      %24 = sbr.rel (%p22) target = $region8
    $region5: #{tpu_custom_call.1} parent=1 // loop_body
      %s26 = ssub.s32 %s21, 1
      %s27 = ssub.s32 %s21, 2
      %s34 = sadd.s32 1, %s29
      %p35 = scmp.ge.s32.totalorder %s34, 3
      %s36 = scalar_select %p35, 0, %s34
      %s37 = sadd.s32 1, %s28
      %s38 = scalar_select %p35, %s37, %s28
      %p39 = scmp.ge.s32.totalorder %s38, 2
      %s40 = scalar_select %p39, 0, %s38
      %s41 = ssub.s32 %s28, %s40
      %s42 = ssub.s32 %s29, %s36
      %s43 = sor.u32 %s41, %s42
      %p44 = scmp.eq.s32.totalorder %s43, 0
      %s46 = sadd.s32 %s45, 1
      %s47 = scalar_select %p44, %s45, %s46
      %p50 = pneg %p44
      %p51 = scmp.eq.s32.totalorder %s21, 5
      %p52 = por %p50, %p51
      %p53 = scmp.ne.s32.totalorder %s45, %s48
      %p54 = scmp.eq.s32.totalorder %s21, 0
      %p55 = por %p53, %p54
      %p56 = scmp.ne.s32.totalorder %s45, %s48
      %p57 = scmp.eq.s32.totalorder %s26, 5
      %p58 = por %p56, %p57
      %p59 = scmp.ne.s32.totalorder %s48, %s49
      %p60 = scmp.eq.s32.totalorder %s26, 0
      %p61 = por %p59, %p60
      %p62 = scmp.ne.s32.totalorder %s48, %s49
      %p63 = scmp.eq.s32.totalorder %s27, 5
      %p64 = por %p62, %p63
      %p66 = scmp.ne.s32.totalorder %s49, %s65
      %p67 = scmp.eq.s32.totalorder %s27, 0
      %p68 = por %p66, %p67
      %s69 = ssub.s32 %s28, %s40
      %s70 = ssub.s32 %s29, %s36
      %s71 = sor.u32 %s69, %s70
      %p72 = scmp.eq.s32.totalorder %s71, 0
      %s74 = sadd.s32 %s73, 1
      %s75 = scalar_select %p72, %s73, %s74
      %p78 = pneg %p72
      %p79 = scmp.eq.s32.totalorder %s21, 5
      %p80 = por %p78, %p79
      %p81 = scmp.ne.s32.totalorder %s73, %s76
      %p82 = scmp.eq.s32.totalorder %s21, 0
      %p83 = por %p81, %p82
      %p84 = scmp.ne.s32.totalorder %s73, %s76
      %p85 = scmp.eq.s32.totalorder %s26, 5
      %p86 = por %p84, %p85
      %p87 = scmp.ne.s32.totalorder %s76, %s77
      %p88 = scmp.eq.s32.totalorder %s26, 0
      %p89 = por %p87, %p88
      %p90 = scmp.ne.s32.totalorder %s76, %s77
      %p91 = scmp.eq.s32.totalorder %s27, 5
      %p92 = por %p90, %p91
      %p94 = scmp.ne.s32.totalorder %s77, %s93
      %p95 = scmp.eq.s32.totalorder %s27, 0
      %p96 = por %p94, %p95
      %s98 = sadd.s32 %s97, 1
      %p101 = scmp.eq.s32.totalorder %s21, 5
      %p102 = scmp.ne.s32.totalorder %s97, %s99
      %p103 = scmp.eq.s32.totalorder %s21, 0
      %p104 = por %p102, %p103
      %p105 = scmp.ne.s32.totalorder %s97, %s99
      %p106 = scmp.eq.s32.totalorder %s26, 5
      %p107 = por %p105, %p106
      %p108 = scmp.ne.s32.totalorder %s99, %s100
      %p109 = scmp.eq.s32.totalorder %s26, 0
      %p110 = por %p108, %p109
      %p111 = scmp.ne.s32.totalorder %s99, %s100
      %p112 = scmp.eq.s32.totalorder %s27, 5
      %p113 = por %p111, %p112
      %p115 = scmp.ne.s32.totalorder %s100, %s114
      %p116 = scmp.eq.s32.totalorder %s27, 0
      %p117 = por %p115, %p116
      %s119 = sadd.s32 %s118, 1
      %p122 = scmp.eq.s32.totalorder %s21, 5
      %p123 = scmp.ne.s32.totalorder %s118, %s120
      %p124 = scmp.eq.s32.totalorder %s21, 0
      %p125 = por %p123, %p124
      %p126 = scmp.ne.s32.totalorder %s118, %s120
      %p127 = scmp.eq.s32.totalorder %s26, 5
      %p128 = por %p126, %p127
      %p129 = scmp.ne.s32.totalorder %s120, %s121
      %p130 = scmp.eq.s32.totalorder %s26, 0
      %p131 = por %p129, %p130
      %p132 = scmp.ne.s32.totalorder %s120, %s121
      %p133 = scmp.eq.s32.totalorder %s27, 5
      %p134 = por %p132, %p133
      %p136 = scmp.ne.s32.totalorder %s121, %s135
      %p137 = scmp.eq.s32.totalorder %s27, 0
      %p138 = por %p136, %p137
      %s140 = sadd.s32 %s139, 1
      %p143 = scmp.eq.s32.totalorder %s21, 5
      %p144 = scmp.ne.s32.totalorder %s139, %s141
      %p145 = scmp.eq.s32.totalorder %s21, 0
      %p146 = por %p144, %p145
      %p147 = scmp.ne.s32.totalorder %s139, %s141
      %p148 = scmp.eq.s32.totalorder %s26, 5
      %p149 = por %p147, %p148
      %p150 = scmp.ne.s32.totalorder %s141, %s142
      %p151 = scmp.eq.s32.totalorder %s26, 0
      %p152 = por %p150, %p151
      %p153 = scmp.ne.s32.totalorder %s141, %s142
      %p154 = scmp.eq.s32.totalorder %s27, 5
      %p155 = por %p153, %p154
      %p157 = scmp.ne.s32.totalorder %s142, %s156
      %p158 = scmp.eq.s32.totalorder %s27, 0
      %p159 = por %p157, %p158
      %s161 = sadd.s32 %s160, 1
      %p164 = scmp.eq.s32.totalorder %s21, 5
      %p165 = scmp.ne.s32.totalorder %s160, %s162
      %p166 = scmp.eq.s32.totalorder %s21, 0
      %p167 = por %p165, %p166
      %p168 = scmp.ne.s32.totalorder %s160, %s162
      %p169 = scmp.eq.s32.totalorder %s26, 5
      %p170 = por %p168, %p169
      %p171 = scmp.ne.s32.totalorder %s162, %s163
      %p172 = scmp.eq.s32.totalorder %s26, 0
      %p173 = por %p171, %p172
      %p174 = scmp.ne.s32.totalorder %s162, %s163
      %p175 = scmp.eq.s32.totalorder %s27, 5
      %p176 = por %p174, %p175
      %p178 = scmp.ne.s32.totalorder %s163, %s177
      %p179 = scmp.eq.s32.totalorder %s27, 0
      %p180 = por %p178, %p179
      %s182 = sadd.s32 %s181, 1
      %p185 = scmp.eq.s32.totalorder %s21, 5
      %p186 = scmp.ne.s32.totalorder %s181, %s183
      %p187 = scmp.eq.s32.totalorder %s21, 0
      %p188 = por %p186, %p187
      %p189 = scmp.ne.s32.totalorder %s181, %s183
      %p190 = scmp.eq.s32.totalorder %s26, 5
      %p191 = por %p189, %p190
      %p192 = scmp.ne.s32.totalorder %s183, %s184
      %p193 = scmp.eq.s32.totalorder %s26, 0
      %p194 = por %p192, %p193
      %p195 = scmp.ne.s32.totalorder %s183, %s184
      %p196 = scmp.eq.s32.totalorder %s27, 5
      %p197 = por %p195, %p196
      %p199 = scmp.ne.s32.totalorder %s184, %s198
      %p200 = scmp.eq.s32.totalorder %s27, 0
      %p201 = por %p199, %p200
      %s203 = sadd.s32 %s202, 1
      %p206 = scmp.eq.s32.totalorder %s21, 5
      %p207 = scmp.ne.s32.totalorder %s202, %s204
      %p208 = scmp.eq.s32.totalorder %s21, 0
      %p209 = por %p207, %p208
      %p210 = scmp.ne.s32.totalorder %s202, %s204
      %p211 = scmp.eq.s32.totalorder %s26, 5
      %p212 = por %p210, %p211
      %p213 = scmp.ne.s32.totalorder %s204, %s205
      %p214 = scmp.eq.s32.totalorder %s26, 0
      %p215 = por %p213, %p214
      %p216 = scmp.ne.s32.totalorder %s204, %s205
      %p217 = scmp.eq.s32.totalorder %s27, 5
      %p218 = por %p216, %p217
      %p220 = scmp.ne.s32.totalorder %s205, %s219
      %p221 = scmp.eq.s32.totalorder %s27, 0
      %p222 = por %p220, %p221
      %s223 = ssub.s32 %s28, %s40
      %s224 = ssub.s32 %s29, %s36
      %s225 = sor.u32 %s223, %s224
      %p226 = scmp.eq.s32.totalorder %s225, 0
      %s228 = sadd.s32 %s227, 1
      %s229 = scalar_select %p226, %s227, %s228
      %p232 = pneg %p226
      %p233 = scmp.eq.s32.totalorder %s21, 5
      %p234 = por %p232, %p233
      %p235 = scmp.ne.s32.totalorder %s227, %s230
      %p236 = scmp.eq.s32.totalorder %s21, 0
      %p237 = por %p235, %p236
      %p238 = scmp.ne.s32.totalorder %s227, %s230
      %p239 = scmp.eq.s32.totalorder %s26, 5
      %p240 = por %p238, %p239
      %p241 = scmp.ne.s32.totalorder %s230, %s231
      %p242 = scmp.eq.s32.totalorder %s26, 0
      %p243 = por %p241, %p242
      %p244 = scmp.ne.s32.totalorder %s230, %s231
      %p245 = scmp.eq.s32.totalorder %s27, 5
      %p246 = por %p244, %p245
      %p248 = scmp.ne.s32.totalorder %s231, %s247
      %p249 = scmp.eq.s32.totalorder %s27, 0
      %p250 = por %p248, %p249
      %p251 = scmp.le.s32.totalorder 1, %s21
      %p252 = scmp.lt.s32.totalorder %s21, 7
      %p253 = pnand %p251, %p252
      %p254 = pneg %p253
      // Predicated region
      $region9: #{tpu_custom_call.1} parent=5 // pred_check
        _
      $region10: #{tpu_custom_call.1} parent=5 // pred_check_branch
        %256 = sbr.rel (%p253) target = $region12
      $region11: #{tpu_custom_call.1} parent=5 // pred_region
        %s257 = ssub.s32 %s21, 1
        // Predicated region
        $region13: #{tpu_custom_call.1} parent=11 // pred_check
          %p258 = pneg %p110
        $region14: #{tpu_custom_call.1} parent=11 // pred_check_branch
          %260 = sbr.rel (%p258) target = $region16
        $region15: #{tpu_custom_call.1} parent=11 // pred_region
          _
        $region16: #{tpu_custom_call.1} parent=11 // pred_fallthru
          _
        // Predicated region
        $region17: #{tpu_custom_call.1} parent=11 // pred_check
          %p261 = pneg %p131
        $region18: #{tpu_custom_call.1} parent=11 // pred_check_branch
          %263 = sbr.rel (%p261) target = $region20
        $region19: #{tpu_custom_call.1} parent=11 // pred_region
          _
        $region20: #{tpu_custom_call.1} parent=11 // pred_fallthru
          _
        // Predicated region
        $region21: #{tpu_custom_call.1} parent=11 // pred_check
          %p264 = pneg %p152
        $region22: #{tpu_custom_call.1} parent=11 // pred_check_branch
          %266 = sbr.rel (%p264) target = $region24
        $region23: #{tpu_custom_call.1} parent=11 // pred_region
          _
        $region24: #{tpu_custom_call.1} parent=11 // pred_fallthru
          _
        // Predicated region
        $region25: #{tpu_custom_call.1} parent=11 // pred_check
          %p267 = pneg %p173
        $region26: #{tpu_custom_call.1} parent=11 // pred_check_branch
          %269 = sbr.rel (%p267) target = $region28
        $region27: #{tpu_custom_call.1} parent=11 // pred_region
          _
        $region28: #{tpu_custom_call.1} parent=11 // pred_fallthru
          _
        // Predicated region
        $region29: #{tpu_custom_call.1} parent=11 // pred_check
          %p270 = pneg %p194
        $region30: #{tpu_custom_call.1} parent=11 // pred_check_branch
          %272 = sbr.rel (%p270) target = $region32
        $region31: #{tpu_custom_call.1} parent=11 // pred_region
          %s274 = ssub.s32 8192, 8192
          %275 = vsyncadd [#allocation6], %s274
          %s276 = sshll.u32 [#allocation5], 4
          %s277 = int_to_ptr.vmem [resolvable:$true] %s276
          %282 = dma.hbm_to_vmem [thread:$0]  %s6, 8192, %s277, [#allocation6], 128, 128, 8
        $region32: #{tpu_custom_call.1} parent=11 // pred_fallthru
          _
        // Predicated region
        $region33: #{tpu_custom_call.1} parent=11 // pred_check
          %p283 = pneg %p215
        $region34: #{tpu_custom_call.1} parent=11 // pred_check_branch
          %285 = sbr.rel (%p283) target = $region36
        $region35: #{tpu_custom_call.1} parent=11 // pred_region
          _
        $region36: #{tpu_custom_call.1} parent=11 // pred_fallthru
          _
      $region12: #{tpu_custom_call.1} parent=5 // pred_fallthru
        _
      %p286 = scmp.lt.s32.totalorder %s21, 6
      // Predicated region
      $region37: #{tpu_custom_call.1} parent=5 // pred_check
        %p287 = pneg %p286
      $region38: #{tpu_custom_call.1} parent=5 // pred_check_branch
        %289 = sbr.rel (%p287) target = $region40
      $region39: #{tpu_custom_call.1} parent=5 // pred_region
        // Predicated region
        $region41: #{tpu_custom_call.1} parent=39 // pred_check
          %p290 = pneg %p55
        $region42: #{tpu_custom_call.1} parent=39 // pred_check_branch
          %292 = sbr.rel (%p290) target = $region44
        $region43: #{tpu_custom_call.1} parent=39 // pred_region
          %s293 = sand.u32 %s45, 1
          %s294 = scalar_lea.sflag [#allocation3], %s293
          %s295 = sand.u32 %s45, 1
          %s296 = smul.addr %s295, 32
          %s297 = scalar_lea.vmem [#allocation2], %s296
          %s298 = smul.u32 4, %s29
          %s299 = ssub.s32 9, %s298
          %p300 = scmp.lt.s32.totalorder %s299, 4
          %s301 = scalar_select %p300, %s299, 4
          %s302 = smul.u32 128, %s301
          %s304 = ssub.s32 512, %s302
          %305 = vsyncadd %s294, %s304
          %p306 = scmp.ne.s32.totalorder 0, %s302
          %s307 = smul.addr %s28, 9
          %s308 = sadd.s32 %s298, %s307
          %s309 = smul.addr %s308, 128
          %s310 = scalar_lea.hbm %s0, %s309
          %s311 = smul.u32 8, %s301
          %s312 = sshll.u32 %s297, 4
          %s313 = int_to_ptr.vmem [resolvable:$true] %s312
          %s314 = sshll.u32 %s311, 4
          %318 = dma.hbm_to_vmem [thread:$0]  (%p306), %s310, %s314, %s313, %s294, 128, 128, 8
        $region44: #{tpu_custom_call.1} parent=39 // pred_fallthru
          _
        // Predicated region
        $region45: #{tpu_custom_call.1} parent=39 // pred_check
          %p319 = pneg %p83
        $region46: #{tpu_custom_call.1} parent=39 // pred_check_branch
          %321 = sbr.rel (%p319) target = $region48
        $region47: #{tpu_custom_call.1} parent=39 // pred_region
          %p322 = scmp.lt.s32.totalorder %s28, 1
          %s323 = scalar_select %p322, %s28, 1
          %p324 = scmp.lt.s32.totalorder %s29, 2
          %s325 = scalar_select %p324, %s29, 2
          %s326 = smul.addr %s323, 3
          %s327 = sadd.s32 %s325, %s326
          %s328 = smul.addr %s327, 8
          %s329 = scalar_lea.vmem %s1, %s328
        $region48: #{tpu_custom_call.1} parent=39 // pred_fallthru
          _
      $region40: #{tpu_custom_call.1} parent=5 // pred_fallthru
        _
      %p330 = scmp.le.s32.totalorder 1, %s21
      %p331 = scmp.lt.s32.totalorder %s21, 7
      %p332 = pnand %p330, %p331
      %p333 = pneg %p332
      // Predicated region
      $region49: #{tpu_custom_call.1} parent=5 // pred_check
        _
      $region50: #{tpu_custom_call.1} parent=5 // pred_check_branch
        %335 = sbr.rel (%p332) target = $region52
      $region51: #{tpu_custom_call.1} parent=5 // pred_region
        %s336 = ssub.s32 %s21, 1
        %s337 = sand.u32 %s48, 1
        %s338 = scalar_lea.sflag [#allocation3], %s337
        %s339 = sand.u32 %s48, 1
        %s340 = smul.addr %s339, 32
        %s341 = scalar_lea.vmem [#allocation2], %s340
        // Predicated region
        $region53: #{tpu_custom_call.1} parent=51 // pred_check
          %p342 = pneg %p61
        $region54: #{tpu_custom_call.1} parent=51 // pred_check_branch
          %344 = sbr.rel (%p342) target = $region56
        $region55: #{tpu_custom_call.1} parent=51 // pred_region
          %345 = dma.done %s338, 512
        $region56: #{tpu_custom_call.1} parent=51 // pred_fallthru
          _
        // Predicated region
        $region57: #{tpu_custom_call.1} parent=51 // pred_check
          %p346 = pneg %p194
        $region58: #{tpu_custom_call.1} parent=51 // pred_check_branch
          %348 = sbr.rel (%p346) target = $region60
        $region59: #{tpu_custom_call.1} parent=51 // pred_region
          %349 = dma.done [#allocation6], 8192
        $region60: #{tpu_custom_call.1} parent=51 // pred_fallthru
          _
        %s350 = sand.u32 %s48, 1
        %s351 = scalar_lea.sflag [#allocation3], %s350
        %s352 = sand.u32 %s48, 1
        %s353 = smul.addr %s352, 32
        %s354 = scalar_lea.vmem [#allocation2], %s353
        %p355 = pneg %p61
        %p356 = pneg %p58
        %p357 = scmp.lt.s32.totalorder %s30, 1
        %s358 = scalar_select %p357, %s30, 1
        %p359 = scmp.lt.s32.totalorder %s31, 2
        %s360 = scalar_select %p359, %s31, 2
        %s361 = smul.addr %s358, 3
        %s362 = sadd.s32 %s360, %s361
        %s363 = smul.addr %s362, 8
        %s364 = scalar_lea.vmem %s1, %s363
        %p365 = pneg %p89
        %p366 = pneg %p86
        %p367 = pneg %p110
        %p368 = pneg %p107
        %p369 = pneg %p131
        %p370 = pneg %p128
        %p371 = pneg %p152
        %p372 = pneg %p149
        %p373 = pneg %p173
        %p374 = pneg %p170
        %p375 = pneg %p194
        %p376 = pneg %p191
        %p377 = pneg %p215
        %p378 = pneg %p212
        %p379 = pneg %p243
        %p380 = pneg %p240
        %s381 = sand.u32 %s230, 1
        %s382 = scalar_lea.sflag [#allocation4], %s381
        %s383 = sand.u32 %s230, 1
        %s384 = smul.addr %s383, 32
        %s385 = scalar_lea.vmem [#allocation7], %s384
        %s386 = smul.u32 4, %s31
        %s387 = ssub.s32 9, %s386
        %p388 = scmp.lt.s32.totalorder %s387, 4
        %s389 = scalar_select %p388, %s387, 4
        %s390 = smul.u32 128, %s389
        %p391 = scmp.lt.s32.totalorder %s30, 1
        %s392 = scalar_select %p391, %s30, 1
        %p393 = scmp.lt.s32.totalorder %s31, 2
        %s394 = scalar_select %p393, %s31, 2
        %s395 = smul.addr %s392, 3
        %s396 = sadd.s32 %s394, %s395
        %s397 = smul.addr %s396, 8
        %s398 = scalar_lea.vmem %s1, %s397
        %s399 = smul.u32 4, %s31
        %s400 = ssub.s32 9, %s399
        %p401 = scmp.lt.s32.totalorder %s400, 4
        %s402 = scalar_select %p401, %s400, 4
        %s403 = smul.u32 128, %s402
        %v404 = vld [vmem:[%s2] sm:$0x1]
        %v405 = vld [vmem:[%s3] sm:$0x1]
        %v406 = vld [vmem:[%s341] sm:$0xff]
        %v407 = vld [vmem:[%s341 + $0x8] sm:$0xff]
        %v408 = vld [vmem:[%s341 + $0x10] sm:$0xff]
        %v409 = vld [vmem:[%s341 + $0x18] sm:$0xff]
        %410 = vadd.xlane.f32.xlu0 %v406
        %v411 = vpop.xlane.xlu0 %410
        %412 = vadd.xlane.f32.xlu0 %v407
        %v413 = vpop.xlane.xlu0 %412
        %414 = vadd.xlane.f32.xlu0 %v408
        %v415 = vpop.xlane.xlu0 %414
        %416 = vadd.xlane.f32.xlu0 %v409
        %v417 = vpop.xlane.xlu0 %416
        %v418 = vrcp.pop 128.0
        %v419 = vmul.f32 %v411, %v418
        %v420 = vmul.f32 %v413, %v418
        %v421 = vmul.f32 %v415, %v418
        %v422 = vmul.f32 %v417, %v418
        %v423 = vsub.f32 %v406, %v419
        %v424 = vsub.f32 %v407, %v420
        %v425 = vsub.f32 %v408, %v421
        %v426 = vsub.f32 %v409, %v422
        %v427 = vmul.f32 %v423, %v423
        %v428 = vmul.f32 %v424, %v424
        %v429 = vmul.f32 %v425, %v425
        %v430 = vmul.f32 %v426, %v426
        %431 = vadd.xlane.f32.xlu0 %v427
        %v432 = vpop.xlane.xlu0 %431
        %433 = vadd.xlane.f32.xlu0 %v428
        %v434 = vpop.xlane.xlu0 %433
        %435 = vadd.xlane.f32.xlu0 %v429
        %v436 = vpop.xlane.xlu0 %435
        %437 = vadd.xlane.f32.xlu0 %v430
        %v438 = vpop.xlane.xlu0 %437
        %v439 = vmul.f32 %v432, %v418
        %v440 = vmul.f32 %v434, %v418
        %v441 = vmul.f32 %v436, %v418
        %v442 = vmul.f32 %v438, %v418
        %v443 = vadd.f32 %v439, 1e-05
        %v444 = vadd.f32 %v440, 1e-05
        %v445 = vadd.f32 %v441, 1e-05
        %v446 = vadd.f32 %v442, 1e-05
        %v447 = vrsqrt.pop %v443
        %v448 = vrsqrt.pop %v444
        %v449 = vrsqrt.pop %v445
        %v450 = vrsqrt.pop %v446
        %v451 = vmul.f32 %v423, %v447
        %v452 = vmul.f32 %v424, %v448
        %v453 = vmul.f32 %v425, %v449
        %v454 = vmul.f32 %v426, %v450
        %v456 = vlaneseq
        %v457 = vshrl.u32 %v456, 7
        %v458 = vsub.s32 0, %v457
        %v459 = vrot.slane %v404, %v458
        %v461 = vmul.f32 %v451, %v459
        %v462 = vmul.f32 %v452, %v459
        %v463 = vmul.f32 %v453, %v459
        %v464 = vmul.f32 %v454, %v459
        %v466 = vlaneseq
        %v467 = vshrl.u32 %v466, 7
        %v468 = vsub.s32 0, %v467
        %v469 = vrot.slane %v405, %v468
        %v471 = vadd.f32 %v461, %v469
        %v472 = vadd.f32 %v462, %v469
        %v473 = vadd.f32 %v463, %v469
        %v474 = vadd.f32 %v464, %v469
        %v475 = vld [vmem:[%s398] sm:$0xff]
        %476 = vadd.xlane.f32.xlu0 %v475
        %v477 = vpop.xlane.xlu0 %476
        %v478 = vmul.f32 %v477, %v418
        %v479 = vsub.f32 %v475, %v478
        %v480 = vmul.f32 %v479, %v479
        %481 = vadd.xlane.f32.xlu0 %v480
        %v482 = vpop.xlane.xlu0 %481
        %v483 = vmul.f32 %v482, %v418
        %v484 = vadd.f32 %v483, 1e-05
        %v485 = vrsqrt.pop %v484
        %v486 = vmul.f32 %v479, %v485
        %v487 = vmul.f32 %v486, %v459
        %v488 = vadd.f32 %v487, %v469
        %s489 = smul.u32 %s31, 32
        %v490 = vlaneseq
        %v491 = vshrl.u32 %v490, 7
        %v492 = vadd.s32 %v491, 8
        %v493 = vadd.s32 %v491, 16
        %v494 = vadd.s32 %v491, 24
        %v495 = vstv %s489
        %v496 = vadd.s32 %v495, %v491
        %v497 = vadd.s32 %v495, %v492
        %v498 = vadd.s32 %v495, %v493
        %v499 = vadd.s32 %v495, %v494
        %vm500 = vcmp.lt.s32.totalorder %v496, 72
        %vm501 = vcmp.lt.s32.totalorder %v497, 72
        %vm502 = vcmp.lt.s32.totalorder %v498, 72
        %vm503 = vcmp.lt.s32.totalorder %v499, 72
        %v504 = vsel %vm500, 1, 0
        %v505 = vsel %vm501, 1, 0
        %v506 = vsel %vm502, 1, 0
        %v507 = vsel %vm503, 1, 0
        %vm508 = vcmp.eq.s32.totalorder %v504, 1
        %vm509 = vcmp.eq.s32.totalorder %v505, 1
        %vm510 = vcmp.eq.s32.totalorder %v506, 1
        %vm511 = vcmp.eq.s32.totalorder %v507, 1
        %v512 = vsel %vm508, %v471, 0.0
        %v513 = vsel %vm509, %v472, 0.0
        %v514 = vsel %vm510, %v473, 0.0
        %v515 = vsel %vm511, %v474, 0.0
        %vm516 = vcmp.lt.s32.totalorder %v491, 3
        %s517 = sadd.s32 %s31, 1
        %s518 = smul.u32 %s517, 32
        %v519 = vstv %s518
        %v520 = vadd.s32 %v519, %v491
        %v521 = vsub.s32 %v496, 8
        %v522 = vsel %vm516, %v520, %v521
        %vm523 = vcmp.ge.s32.totalorder %v522, 0
        %vm524 = vcmp.lt.s32.totalorder %v522, 72
        %vm525 = vmand %vm523, %vm524
        %v526 = vsel %vm525, 1, 0
        %vm527 = vcmp.eq.s32.totalorder %v526, 1
        %v528 = vsel %vm527, %v488, 0.0
        %v530 = vrot.slane %v528, 5
        %vm536 = vcmask 1042432
        %v537 = vrot.slane %v512, 5
        %v538 = vrot.slane %v513, 5
        %v539 = vsel %vm536, %v537, %v538
        %v540 = vrot.slane %v514, 5
        %v541 = vsel %vm536, %v538, %v540
        %v542 = vrot.slane %v515, 5
        %v543 = vsel %vm536, %v540, %v542
        %v549 = vsel %vm536, %v530, %v537
        %v550 = vsel %vm536, %v542, %v530
        %v551 = vld [vmem:[%s4] sm:$0x7f]
        %v552 = vld [vmem:[%s4 + $0x8] sm:$0x7f]
        %v553 = vld [vmem:[%s4 + $0x10] sm:$0x7f]
        %v554 = vld [vmem:[%s4 + $0x18] sm:$0x7f]
        %v555 = vld [vmem:[%s5] sm:$0xf]
        %v556 = vlaneseq
        %v557 = vshrl.u32 %v556, 7
        %v558 = vsub.s32 0, %v557
        %v559 = vrot.slane %v551, %v558
        %v560 = vmul.f32 %v549, %v559
        %v561 = vmul.f32 %v539, %v559
        %v562 = vmul.f32 %v541, %v559
        %v563 = vmul.f32 %v543, %v559
        %v564 = vlaneseq
        %v565 = vshrl.u32 %v564, 7
        %v566 = vsub.s32 1, %v565
        %v567 = vrot.slane %v551, %v566
        %v568 = vmul.f32 %v549, %v567
        %v569 = vmul.f32 %v539, %v567
        %v570 = vmul.f32 %v541, %v567
        %v571 = vmul.f32 %v543, %v567
        %v572 = vmul.f32 %v550, %v567
        %vm578 = vcmask 1046528
        %v579 = vrot.slane %v568, 1
        %v580 = vrot.slane %v569, 1
        %v581 = vsel %vm578, %v579, %v580
        %v582 = vrot.slane %v570, 1
        %v583 = vsel %vm578, %v580, %v582
        %v584 = vrot.slane %v571, 1
        %v585 = vsel %vm578, %v582, %v584
        %v586 = vrot.slane %v572, 1
        %v587 = vsel %vm578, %v584, %v586
        %v592 = vadd.f32 %v560, %v581
        %v593 = vadd.f32 %v561, %v583
        %v594 = vadd.f32 %v562, %v585
        %v595 = vadd.f32 %v563, %v587
        %v596 = vlaneseq
        %v597 = vshrl.u32 %v596, 7
        %v598 = vsub.s32 2, %v597
        %v599 = vrot.slane %v551, %v598
        %v600 = vmul.f32 %v549, %v599
        %v601 = vmul.f32 %v539, %v599
        %v602 = vmul.f32 %v541, %v599
        %v603 = vmul.f32 %v543, %v599
        %v604 = vmul.f32 %v550, %v599
        %vm610 = vcmask 1045504
        %v611 = vrot.slane %v600, 2
        %v612 = vrot.slane %v601, 2
        %v613 = vsel %vm610, %v611, %v612
        %v614 = vrot.slane %v602, 2
        %v615 = vsel %vm610, %v612, %v614
        %v616 = vrot.slane %v603, 2
        %v617 = vsel %vm610, %v614, %v616
        %v618 = vrot.slane %v604, 2
        %v619 = vsel %vm610, %v616, %v618
        %v624 = vadd.f32 %v592, %v613
        %v625 = vadd.f32 %v593, %v615
        %v626 = vadd.f32 %v594, %v617
        %v627 = vadd.f32 %v595, %v619
        %v628 = vlaneseq
        %v629 = vshrl.u32 %v628, 7
        %v630 = vsub.s32 3, %v629
        %v631 = vrot.slane %v551, %v630
        %v632 = vmul.f32 %v549, %v631
        %v633 = vmul.f32 %v539, %v631
        %v634 = vmul.f32 %v541, %v631
        %v635 = vmul.f32 %v543, %v631
        %v636 = vmul.f32 %v550, %v631
        %vm642 = vcmask 1044480
        %v643 = vrot.slane %v632, 3
        %v644 = vrot.slane %v633, 3
        %v645 = vsel %vm642, %v643, %v644
        %v646 = vrot.slane %v634, 3
        %v647 = vsel %vm642, %v644, %v646
        %v648 = vrot.slane %v635, 3
        %v649 = vsel %vm642, %v646, %v648
        %v650 = vrot.slane %v636, 3
        %v651 = vsel %vm642, %v648, %v650
        %v656 = vadd.f32 %v624, %v645
        %v657 = vadd.f32 %v625, %v647
        %v658 = vadd.f32 %v626, %v649
        %v659 = vadd.f32 %v627, %v651
        %v660 = vlaneseq
        %v661 = vshrl.u32 %v660, 7
        %v662 = vsub.s32 4, %v661
        %v663 = vrot.slane %v551, %v662
        %v664 = vmul.f32 %v549, %v663
        %v665 = vmul.f32 %v539, %v663
        %v666 = vmul.f32 %v541, %v663
        %v667 = vmul.f32 %v543, %v663
        %v668 = vmul.f32 %v550, %v663
        %vm674 = vcmask 1043456
        %v675 = vrot.slane %v664, 4
        %v676 = vrot.slane %v665, 4
        %v677 = vsel %vm674, %v675, %v676
        %v678 = vrot.slane %v666, 4
        %v679 = vsel %vm674, %v676, %v678
        %v680 = vrot.slane %v667, 4
        %v681 = vsel %vm674, %v678, %v680
        %v682 = vrot.slane %v668, 4
        %v683 = vsel %vm674, %v680, %v682
        %v688 = vadd.f32 %v656, %v677
        %v689 = vadd.f32 %v657, %v679
        %v690 = vadd.f32 %v658, %v681
        %v691 = vadd.f32 %v659, %v683
        %v692 = vlaneseq
        %v693 = vshrl.u32 %v692, 7
        %v694 = vsub.s32 5, %v693
        %v695 = vrot.slane %v551, %v694
        %v696 = vmul.f32 %v549, %v695
        %v697 = vmul.f32 %v539, %v695
        %v698 = vmul.f32 %v541, %v695
        %v699 = vmul.f32 %v543, %v695
        %v700 = vmul.f32 %v550, %v695
        %v706 = vrot.slane %v696, 5
        %v707 = vrot.slane %v697, 5
        %v708 = vsel %vm536, %v706, %v707
        %v709 = vrot.slane %v698, 5
        %v710 = vsel %vm536, %v707, %v709
        %v711 = vrot.slane %v699, 5
        %v712 = vsel %vm536, %v709, %v711
        %v713 = vrot.slane %v700, 5
        %v714 = vsel %vm536, %v711, %v713
        %v719 = vadd.f32 %v688, %v708
        %v720 = vadd.f32 %v689, %v710
        %v721 = vadd.f32 %v690, %v712
        %v722 = vadd.f32 %v691, %v714
        %v723 = vlaneseq
        %v724 = vshrl.u32 %v723, 7
        %v725 = vsub.s32 6, %v724
        %v726 = vrot.slane %v551, %v725
        %v727 = vmul.f32 %v549, %v726
        %v728 = vmul.f32 %v539, %v726
        %v729 = vmul.f32 %v541, %v726
        %v730 = vmul.f32 %v543, %v726
        %v731 = vmul.f32 %v550, %v726
        %vm737 = vcmask 1041408
        %v738 = vrot.slane %v727, 6
        %v739 = vrot.slane %v728, 6
        %v740 = vsel %vm737, %v738, %v739
        %v741 = vrot.slane %v729, 6
        %v742 = vsel %vm737, %v739, %v741
        %v743 = vrot.slane %v730, 6
        %v744 = vsel %vm737, %v741, %v743
        %v745 = vrot.slane %v731, 6
        %v746 = vsel %vm737, %v743, %v745
        %v751 = vadd.f32 %v719, %v740
        %v752 = vadd.f32 %v720, %v742
        %v753 = vadd.f32 %v721, %v744
        %v754 = vadd.f32 %v722, %v746
        %v755 = vlaneseq
        %v756 = vshrl.u32 %v755, 7
        %v757 = vsub.s32 0, %v756
        %v758 = vrot.slane %v555, %v757
        %v759 = vadd.f32 %v751, %v758
        %v760 = vadd.f32 %v752, %v758
        %v761 = vadd.f32 %v753, %v758
        %v762 = vadd.f32 %v754, %v758
        %v763 = vmul.f32 %v759, 0.3
        %v764 = vmul.f32 %v760, 0.3
        %v765 = vmul.f32 %v761, 0.3
        %v766 = vmul.f32 %v762, 0.3
        %v767 = vmax.f32 %v759, %v763
        %v768 = vmax.f32 %v760, %v764
        %v769 = vmax.f32 %v761, %v765
        %v770 = vmax.f32 %v762, %v766
        %v771 = vld [vmem:[#allocation5] sm:$0xff]
        %v772 = vld [vmem:[#allocation5 + $0x8] sm:$0xff]
        %v773 = vld [vmem:[#allocation5 + $0x10] sm:$0xff]
        %v774 = vld [vmem:[#allocation5 + $0x18] sm:$0xff]
        %v775 = vld [vmem:[#allocation5 + $0x20] sm:$0xff]
        %v776 = vld [vmem:[#allocation5 + $0x28] sm:$0xff]
        %v777 = vld [vmem:[#allocation5 + $0x30] sm:$0xff]
        %v778 = vld [vmem:[#allocation5 + $0x38] sm:$0xff]
        %v779 = vld [vmem:[#allocation5 + $0x40] sm:$0xff]
        %v780 = vld [vmem:[#allocation5 + $0x48] sm:$0xff]
        %v781 = vld [vmem:[#allocation5 + $0x50] sm:$0xff]
        %v782 = vld [vmem:[#allocation5 + $0x58] sm:$0xff]
        %v783 = vld [vmem:[#allocation5 + $0x60] sm:$0xff]
        %v784 = vld [vmem:[#allocation5 + $0x68] sm:$0xff]
        %v785 = vld [vmem:[#allocation5 + $0x70] sm:$0xff]
        %v786 = vld [vmem:[#allocation5 + $0x78] sm:$0xff]
        %v787 = vlaneseq
        %v788 = vshrl.u32 %v787, 7
        %v789 = vsub.s32 0, %v788
        %v790 = vrot.slane %v552, %v789
        %v791 = vmul.f32 %v549, %v790
        %v792 = vmul.f32 %v539, %v790
        %v793 = vmul.f32 %v541, %v790
        %v794 = vmul.f32 %v543, %v790
        %v795 = vlaneseq
        %v796 = vshrl.u32 %v795, 7
        %v797 = vsub.s32 1, %v796
        %v798 = vrot.slane %v552, %v797
        %v799 = vmul.f32 %v549, %v798
        %v800 = vmul.f32 %v539, %v798
        %v801 = vmul.f32 %v541, %v798
        %v802 = vmul.f32 %v543, %v798
        %v803 = vmul.f32 %v550, %v798
        %v809 = vrot.slane %v799, 1
        %v810 = vrot.slane %v800, 1
        %v811 = vsel %vm578, %v809, %v810
        %v812 = vrot.slane %v801, 1
        %v813 = vsel %vm578, %v810, %v812
        %v814 = vrot.slane %v802, 1
        %v815 = vsel %vm578, %v812, %v814
        %v816 = vrot.slane %v803, 1
        %v817 = vsel %vm578, %v814, %v816
        %v822 = vadd.f32 %v791, %v811
        %v823 = vadd.f32 %v792, %v813
        %v824 = vadd.f32 %v793, %v815
        %v825 = vadd.f32 %v794, %v817
        %v826 = vlaneseq
        %v827 = vshrl.u32 %v826, 7
        %v828 = vsub.s32 2, %v827
        %v829 = vrot.slane %v552, %v828
        %v830 = vmul.f32 %v549, %v829
        %v831 = vmul.f32 %v539, %v829
        %v832 = vmul.f32 %v541, %v829
        %v833 = vmul.f32 %v543, %v829
        %v834 = vmul.f32 %v550, %v829
        %v840 = vrot.slane %v830, 2
        %v841 = vrot.slane %v831, 2
        %v842 = vsel %vm610, %v840, %v841
        %v843 = vrot.slane %v832, 2
        %v844 = vsel %vm610, %v841, %v843
        %v845 = vrot.slane %v833, 2
        %v846 = vsel %vm610, %v843, %v845
        %v847 = vrot.slane %v834, 2
        %v848 = vsel %vm610, %v845, %v847
        %v853 = vadd.f32 %v822, %v842
        %v854 = vadd.f32 %v823, %v844
        %v855 = vadd.f32 %v824, %v846
        %v856 = vadd.f32 %v825, %v848
        %v857 = vlaneseq
        %v858 = vshrl.u32 %v857, 7
        %v859 = vsub.s32 3, %v858
        %v860 = vrot.slane %v552, %v859
        %v861 = vmul.f32 %v549, %v860
        %v862 = vmul.f32 %v539, %v860
        %v863 = vmul.f32 %v541, %v860
        %v864 = vmul.f32 %v543, %v860
        %v865 = vmul.f32 %v550, %v860
        %v871 = vrot.slane %v861, 3
        %v872 = vrot.slane %v862, 3
        %v873 = vsel %vm642, %v871, %v872
        %v874 = vrot.slane %v863, 3
        %v875 = vsel %vm642, %v872, %v874
        %v876 = vrot.slane %v864, 3
        %v877 = vsel %vm642, %v874, %v876
        %v878 = vrot.slane %v865, 3
        %v879 = vsel %vm642, %v876, %v878
        %v884 = vadd.f32 %v853, %v873
        %v885 = vadd.f32 %v854, %v875
        %v886 = vadd.f32 %v855, %v877
        %v887 = vadd.f32 %v856, %v879
        %v888 = vlaneseq
        %v889 = vshrl.u32 %v888, 7
        %v890 = vsub.s32 4, %v889
        %v891 = vrot.slane %v552, %v890
        %v892 = vmul.f32 %v549, %v891
        %v893 = vmul.f32 %v539, %v891
        %v894 = vmul.f32 %v541, %v891
        %v895 = vmul.f32 %v543, %v891
        %v896 = vmul.f32 %v550, %v891
        %v902 = vrot.slane %v892, 4
        %v903 = vrot.slane %v893, 4
        %v904 = vsel %vm674, %v902, %v903
        %v905 = vrot.slane %v894, 4
        %v906 = vsel %vm674, %v903, %v905
        %v907 = vrot.slane %v895, 4
        %v908 = vsel %vm674, %v905, %v907
        %v909 = vrot.slane %v896, 4
        %v910 = vsel %vm674, %v907, %v909
        %v915 = vadd.f32 %v884, %v904
        %v916 = vadd.f32 %v885, %v906
        %v917 = vadd.f32 %v886, %v908
        %v918 = vadd.f32 %v887, %v910
        %v919 = vlaneseq
        %v920 = vshrl.u32 %v919, 7
        %v921 = vsub.s32 5, %v920
        %v922 = vrot.slane %v552, %v921
        %v923 = vmul.f32 %v549, %v922
        %v924 = vmul.f32 %v539, %v922
        %v925 = vmul.f32 %v541, %v922
        %v926 = vmul.f32 %v543, %v922
        %v927 = vmul.f32 %v550, %v922
        %v933 = vrot.slane %v923, 5
        %v934 = vrot.slane %v924, 5
        %v935 = vsel %vm536, %v933, %v934
        %v936 = vrot.slane %v925, 5
        %v937 = vsel %vm536, %v934, %v936
        %v938 = vrot.slane %v926, 5
        %v939 = vsel %vm536, %v936, %v938
        %v940 = vrot.slane %v927, 5
        %v941 = vsel %vm536, %v938, %v940
        %v946 = vadd.f32 %v915, %v935
        %v947 = vadd.f32 %v916, %v937
        %v948 = vadd.f32 %v917, %v939
        %v949 = vadd.f32 %v918, %v941
        %v950 = vlaneseq
        %v951 = vshrl.u32 %v950, 7
        %v952 = vsub.s32 6, %v951
        %v953 = vrot.slane %v552, %v952
        %v954 = vmul.f32 %v549, %v953
        %v955 = vmul.f32 %v539, %v953
        %v956 = vmul.f32 %v541, %v953
        %v957 = vmul.f32 %v543, %v953
        %v958 = vmul.f32 %v550, %v953
        %v964 = vrot.slane %v954, 6
        %v965 = vrot.slane %v955, 6
        %v966 = vsel %vm737, %v964, %v965
        %v967 = vrot.slane %v956, 6
        %v968 = vsel %vm737, %v965, %v967
        %v969 = vrot.slane %v957, 6
        %v970 = vsel %vm737, %v967, %v969
        %v971 = vrot.slane %v958, 6
        %v972 = vsel %vm737, %v969, %v971
        %v977 = vadd.f32 %v946, %v966
        %v978 = vadd.f32 %v947, %v968
        %v979 = vadd.f32 %v948, %v970
        %v980 = vadd.f32 %v949, %v972
        %v981 = vlaneseq
        %v982 = vshrl.u32 %v981, 7
        %v983 = vsub.s32 1, %v982
        %v984 = vrot.slane %v555, %v983
        %v985 = vadd.f32 %v977, %v984
        %v986 = vadd.f32 %v978, %v984
        %v987 = vadd.f32 %v979, %v984
        %v988 = vadd.f32 %v980, %v984
        %v989 = vmul.f32 %v985, 0.3
        %v990 = vmul.f32 %v986, 0.3
        %v991 = vmul.f32 %v987, 0.3
        %v992 = vmul.f32 %v988, 0.3
        %v993 = vmax.f32 %v985, %v989
        %v994 = vmax.f32 %v986, %v990
        %v995 = vmax.f32 %v987, %v991
        %v996 = vmax.f32 %v988, %v992
        %s997 = scalar_lea.vmem [#allocation5], 128
        %v998 = vld [vmem:[%s997] sm:$0xff]
        %v999 = vld [vmem:[%s997 + $0x8] sm:$0xff]
        %v1000 = vld [vmem:[%s997 + $0x10] sm:$0xff]
        %v1001 = vld [vmem:[%s997 + $0x18] sm:$0xff]
        %v1002 = vld [vmem:[%s997 + $0x20] sm:$0xff]
        %v1003 = vld [vmem:[%s997 + $0x28] sm:$0xff]
        %v1004 = vld [vmem:[%s997 + $0x30] sm:$0xff]
        %v1005 = vld [vmem:[%s997 + $0x38] sm:$0xff]
        %v1006 = vld [vmem:[%s997 + $0x40] sm:$0xff]
        %v1007 = vld [vmem:[%s997 + $0x48] sm:$0xff]
        %v1008 = vld [vmem:[%s997 + $0x50] sm:$0xff]
        %v1009 = vld [vmem:[%s997 + $0x58] sm:$0xff]
        %v1010 = vld [vmem:[%s997 + $0x60] sm:$0xff]
        %v1011 = vld [vmem:[%s997 + $0x68] sm:$0xff]
        %v1012 = vld [vmem:[%s997 + $0x70] sm:$0xff]
        %v1013 = vld [vmem:[%s997 + $0x78] sm:$0xff]
        %1014 = vmatprep.subr.mxu0 0.0
        %1015 = vmatpush1.msra.mxu0 %v998
        %1016 = vmatprep.subr.mxu0 0.0
        %1017 = vmatpush1.msra.mxu0 %v999
        %1018 = vmatprep.subr.mxu0 0.0
        %1019 = vmatpush1.msra.mxu0 %v1000
        %1020 = vmatprep.subr.mxu0 0.0
        %1021 = vmatpush1.msra.mxu0 %v1001
        %1022 = vmatprep.subr.mxu0 0.0
        %1023 = vmatpush1.msra.mxu0 %v1002
        %1024 = vmatprep.subr.mxu0 0.0
        %1025 = vmatpush1.msra.mxu0 %v1003
        %1026 = vmatprep.subr.mxu0 0.0
        %1027 = vmatpush1.msra.mxu0 %v1004
        %1028 = vmatprep.subr.mxu0 0.0
        %1029 = vmatpush1.msra.mxu0 %v1005
        %1030 = vmatprep.subr.mxu0 0.0
        %1031 = vmatpush1.msra.mxu0 %v1006
        %1032 = vmatprep.subr.mxu0 0.0
        %1033 = vmatpush1.msra.mxu0 %v1007
        %1034 = vmatprep.subr.mxu0 0.0
        %1035 = vmatpush1.msra.mxu0 %v1008
        %1036 = vmatprep.subr.mxu0 0.0
        %1037 = vmatpush1.msra.mxu0 %v1009
        %1038 = vmatprep.subr.mxu0 0.0
        %1039 = vmatpush1.msra.mxu0 %v1010
        %1040 = vmatprep.subr.mxu0 0.0
        %1041 = vmatpush1.msra.mxu0 %v1011
        %1042 = vmatprep.subr.mxu0 0.0
        %1043 = vmatpush1.msra.mxu0 %v1012
        %1044 = vmatprep.subr.mxu0 0.0
        %1045 = vmatpush1.msra.mxu0 %v1013
        %1046 = vmatprep.subr.mxu0 0.0
        %1047 = vmatpush1.msra.mxu0 0.0
        %1048 = vmatprep.subr.mxu0 0.0
        %1049 = vmatpush1.msra.mxu0 0.0
        %1050 = vmatprep.subr.mxu0 0.0
        %1051 = vmatpush1.msra.mxu0 0.0
        %1052 = vmatprep.subr.mxu0 0.0
        %1053 = vmatpush1.msra.mxu0 0.0
        %1054 = vmatprep.subr.mxu0 0.0
        %1055 = vmatpush1.msra.mxu0 0.0
        %1056 = vmatprep.subr.mxu0 0.0
        %1057 = vmatpush1.msra.mxu0 0.0
        %1058 = vmatprep.subr.mxu0 0.0
        %1059 = vmatpush1.msra.mxu0 0.0
        %1060 = vmatprep.subr.mxu0 0.0
        %1061 = vmatpush1.msra.mxu0 0.0
        %1062 = vmatprep.subr.mxu0 0.0
        %1063 = vmatpush1.msra.mxu0 0.0
        %1064 = vmatprep.subr.mxu0 0.0
        %1065 = vmatpush1.msra.mxu0 0.0
        %1066 = vmatprep.subr.mxu0 0.0
        %1067 = vmatpush1.msra.mxu0 0.0
        %1068 = vmatprep.subr.mxu0 0.0
        %1069 = vmatpush1.msra.mxu0 0.0
        %1070 = vmatprep.subr.mxu0 0.0
        %1071 = vmatpush1.msra.mxu0 0.0
        %1072 = vmatprep.subr.mxu0 0.0
        %1073 = vmatpush1.msra.mxu0 0.0
        %1074 = vmatprep.subr.mxu0 0.0
        %1075 = vmatpush1.msra.mxu0 0.0
        %1076 = vmatprep.subr.mxu0 0.0
        %1077 = vmatpush1.msra.mxu0 0.0
        %1078 = vmatprep.mubr.f32.mxu0 0.0
        %1079 = vmatmul.mubr.f32.gmra.mrb[0].mxu0 %v993
        %v1080 = vpop.f32.mrb[0].mxu0
        %v1081 = vadd.f32 0.0, %v1080
        %v1082 = vpop.f32.mrb[0].mxu0
        %1083 = vmatprep.mubr.f32.mxu0 0.0
        %1084 = vmatmul.mubr.f32.gmra.mrb[0].mxu0 %v994
        %v1085 = vpop.f32.mrb[0].mxu0
        %v1086 = vadd.f32 0.0, %v1085
        %v1087 = vpop.f32.mrb[0].mxu0
        %1088 = vmatprep.mubr.f32.mxu0 0.0
        %1089 = vmatmul.mubr.f32.gmra.mrb[0].mxu0 %v995
        %v1090 = vpop.f32.mrb[0].mxu0
        %v1091 = vadd.f32 0.0, %v1090
        %v1092 = vpop.f32.mrb[0].mxu0
        %1093 = vmatprep.mubr.f32.mxu0 0.0
        %1094 = vmatmul.mubr.f32.gmra.mrb[0].mxu0 %v996
        %v1095 = vpop.f32.mrb[0].mxu0
        %v1096 = vadd.f32 0.0, %v1095
        %v1097 = vpop.f32.mrb[0].mxu0
        %1098 = vdwg.mxu0
        %1099 = vmatprep.subr.mxu0 0.0
        %1100 = vmatpush1.msra.mxu0 %v771
        %1101 = vmatprep.subr.mxu0 0.0
        %1102 = vmatpush1.msra.mxu0 %v772
        %1103 = vmatprep.subr.mxu0 0.0
        %1104 = vmatpush1.msra.mxu0 %v773
        %1105 = vmatprep.subr.mxu0 0.0
        %1106 = vmatpush1.msra.mxu0 %v774
        %1107 = vmatprep.subr.mxu0 0.0
        %1108 = vmatpush1.msra.mxu0 %v775
        %1109 = vmatprep.subr.mxu0 0.0
        %1110 = vmatpush1.msra.mxu0 %v776
        %1111 = vmatprep.subr.mxu0 0.0
        %1112 = vmatpush1.msra.mxu0 %v777
        %1113 = vmatprep.subr.mxu0 0.0
        %1114 = vmatpush1.msra.mxu0 %v778
        %1115 = vmatprep.subr.mxu0 0.0
        %1116 = vmatpush1.msra.mxu0 %v779
        %1117 = vmatprep.subr.mxu0 0.0
        %1118 = vmatpush1.msra.mxu0 %v780
        %1119 = vmatprep.subr.mxu0 0.0
        %1120 = vmatpush1.msra.mxu0 %v781
        %1121 = vmatprep.subr.mxu0 0.0
        %1122 = vmatpush1.msra.mxu0 %v782
        %1123 = vmatprep.subr.mxu0 0.0
        %1124 = vmatpush1.msra.mxu0 %v783
        %1125 = vmatprep.subr.mxu0 0.0
        %1126 = vmatpush1.msra.mxu0 %v784
        %1127 = vmatprep.subr.mxu0 0.0
        %1128 = vmatpush1.msra.mxu0 %v785
        %1129 = vmatprep.subr.mxu0 0.0
        %1130 = vmatpush1.msra.mxu0 %v786
        %1131 = vmatprep.subr.mxu0 0.0
        %1132 = vmatpush1.msra.mxu0 0.0
        %1133 = vmatprep.subr.mxu0 0.0
        %1134 = vmatpush1.msra.mxu0 0.0
        %1135 = vmatprep.subr.mxu0 0.0
        %1136 = vmatpush1.msra.mxu0 0.0
        %1137 = vmatprep.subr.mxu0 0.0
        %1138 = vmatpush1.msra.mxu0 0.0
        %1139 = vmatprep.subr.mxu0 0.0
        %1140 = vmatpush1.msra.mxu0 0.0
        %1141 = vmatprep.subr.mxu0 0.0
        %1142 = vmatpush1.msra.mxu0 0.0
        %1143 = vmatprep.subr.mxu0 0.0
        %1144 = vmatpush1.msra.mxu0 0.0
        %1145 = vmatprep.subr.mxu0 0.0
        %1146 = vmatpush1.msra.mxu0 0.0
        %1147 = vmatprep.subr.mxu0 0.0
        %1148 = vmatpush1.msra.mxu0 0.0
        %1149 = vmatprep.subr.mxu0 0.0
        %1150 = vmatpush1.msra.mxu0 0.0
        %1151 = vmatprep.subr.mxu0 0.0
        %1152 = vmatpush1.msra.mxu0 0.0
        %1153 = vmatprep.subr.mxu0 0.0
        %1154 = vmatpush1.msra.mxu0 0.0
        %1155 = vmatprep.subr.mxu0 0.0
        %1156 = vmatpush1.msra.mxu0 0.0
        %1157 = vmatprep.subr.mxu0 0.0
        %1158 = vmatpush1.msra.mxu0 0.0
        %1159 = vmatprep.subr.mxu0 0.0
        %1160 = vmatpush1.msra.mxu0 0.0
        %1161 = vmatprep.subr.mxu0 0.0
        %1162 = vmatpush1.msra.mxu0 0.0
        %1163 = vmatprep.mubr.f32.mxu0 0.0
        %1164 = vmatmul.mubr.f32.gmra.mrb[0].mxu0 %v767
        %v1165 = vpop.f32.mrb[0].mxu0
        %v1166 = vadd.f32 %v1081, %v1165
        %v1167 = vpop.f32.mrb[0].mxu0
        %1168 = vmatprep.mubr.f32.mxu0 0.0
        %1169 = vmatmul.mubr.f32.gmra.mrb[0].mxu0 %v768
        %v1170 = vpop.f32.mrb[0].mxu0
        %v1171 = vadd.f32 %v1086, %v1170
        %v1172 = vpop.f32.mrb[0].mxu0
        %1173 = vmatprep.mubr.f32.mxu0 0.0
        %1174 = vmatmul.mubr.f32.gmra.mrb[0].mxu0 %v769
        %v1175 = vpop.f32.mrb[0].mxu0
        %v1176 = vadd.f32 %v1091, %v1175
        %v1177 = vpop.f32.mrb[0].mxu0
        %1178 = vmatprep.mubr.f32.mxu0 0.0
        %1179 = vmatmul.mubr.f32.gmra.mrb[0].mxu0 %v770
        %v1180 = vpop.f32.mrb[0].mxu0
        %v1181 = vadd.f32 %v1096, %v1180
        %v1182 = vpop.f32.mrb[0].mxu0
        %1183 = vdwg.mxu0
        %v1184 = vlaneseq
        %v1185 = vshrl.u32 %v1184, 7
        %v1186 = vsub.s32 0, %v1185
        %v1187 = vrot.slane %v553, %v1186
        %v1188 = vmul.f32 %v549, %v1187
        %v1189 = vmul.f32 %v539, %v1187
        %v1190 = vmul.f32 %v541, %v1187
        %v1191 = vmul.f32 %v543, %v1187
        %v1192 = vlaneseq
        %v1193 = vshrl.u32 %v1192, 7
        %v1194 = vsub.s32 1, %v1193
        %v1195 = vrot.slane %v553, %v1194
        %v1196 = vmul.f32 %v549, %v1195
        %v1197 = vmul.f32 %v539, %v1195
        %v1198 = vmul.f32 %v541, %v1195
        %v1199 = vmul.f32 %v543, %v1195
        %v1200 = vmul.f32 %v550, %v1195
        %v1206 = vrot.slane %v1196, 1
        %v1207 = vrot.slane %v1197, 1
        %v1208 = vsel %vm578, %v1206, %v1207
        %v1209 = vrot.slane %v1198, 1
        %v1210 = vsel %vm578, %v1207, %v1209
        %v1211 = vrot.slane %v1199, 1
        %v1212 = vsel %vm578, %v1209, %v1211
        %v1213 = vrot.slane %v1200, 1
        %v1214 = vsel %vm578, %v1211, %v1213
        %v1219 = vadd.f32 %v1188, %v1208
        %v1220 = vadd.f32 %v1189, %v1210
        %v1221 = vadd.f32 %v1190, %v1212
        %v1222 = vadd.f32 %v1191, %v1214
        %v1223 = vlaneseq
        %v1224 = vshrl.u32 %v1223, 7
        %v1225 = vsub.s32 2, %v1224
        %v1226 = vrot.slane %v553, %v1225
        %v1227 = vmul.f32 %v549, %v1226
        %v1228 = vmul.f32 %v539, %v1226
        %v1229 = vmul.f32 %v541, %v1226
        %v1230 = vmul.f32 %v543, %v1226
        %v1231 = vmul.f32 %v550, %v1226
        %v1237 = vrot.slane %v1227, 2
        %v1238 = vrot.slane %v1228, 2
        %v1239 = vsel %vm610, %v1237, %v1238
        %v1240 = vrot.slane %v1229, 2
        %v1241 = vsel %vm610, %v1238, %v1240
        %v1242 = vrot.slane %v1230, 2
        %v1243 = vsel %vm610, %v1240, %v1242
        %v1244 = vrot.slane %v1231, 2
        %v1245 = vsel %vm610, %v1242, %v1244
        %v1250 = vadd.f32 %v1219, %v1239
        %v1251 = vadd.f32 %v1220, %v1241
        %v1252 = vadd.f32 %v1221, %v1243
        %v1253 = vadd.f32 %v1222, %v1245
        %v1254 = vlaneseq
        %v1255 = vshrl.u32 %v1254, 7
        %v1256 = vsub.s32 3, %v1255
        %v1257 = vrot.slane %v553, %v1256
        %v1258 = vmul.f32 %v549, %v1257
        %v1259 = vmul.f32 %v539, %v1257
        %v1260 = vmul.f32 %v541, %v1257
        %v1261 = vmul.f32 %v543, %v1257
        %v1262 = vmul.f32 %v550, %v1257
        %v1268 = vrot.slane %v1258, 3
        %v1269 = vrot.slane %v1259, 3
        %v1270 = vsel %vm642, %v1268, %v1269
        %v1271 = vrot.slane %v1260, 3
        %v1272 = vsel %vm642, %v1269, %v1271
        %v1273 = vrot.slane %v1261, 3
        %v1274 = vsel %vm642, %v1271, %v1273
        %v1275 = vrot.slane %v1262, 3
        %v1276 = vsel %vm642, %v1273, %v1275
        %v1281 = vadd.f32 %v1250, %v1270
        %v1282 = vadd.f32 %v1251, %v1272
        %v1283 = vadd.f32 %v1252, %v1274
        %v1284 = vadd.f32 %v1253, %v1276
        %v1285 = vlaneseq
        %v1286 = vshrl.u32 %v1285, 7
        %v1287 = vsub.s32 4, %v1286
        %v1288 = vrot.slane %v553, %v1287
        %v1289 = vmul.f32 %v549, %v1288
        %v1290 = vmul.f32 %v539, %v1288
        %v1291 = vmul.f32 %v541, %v1288
        %v1292 = vmul.f32 %v543, %v1288
        %v1293 = vmul.f32 %v550, %v1288
        %v1299 = vrot.slane %v1289, 4
        %v1300 = vrot.slane %v1290, 4
        %v1301 = vsel %vm674, %v1299, %v1300
        %v1302 = vrot.slane %v1291, 4
        %v1303 = vsel %vm674, %v1300, %v1302
        %v1304 = vrot.slane %v1292, 4
        %v1305 = vsel %vm674, %v1302, %v1304
        %v1306 = vrot.slane %v1293, 4
        %v1307 = vsel %vm674, %v1304, %v1306
        %v1312 = vadd.f32 %v1281, %v1301
        %v1313 = vadd.f32 %v1282, %v1303
        %v1314 = vadd.f32 %v1283, %v1305
        %v1315 = vadd.f32 %v1284, %v1307
        %v1316 = vlaneseq
        %v1317 = vshrl.u32 %v1316, 7
        %v1318 = vsub.s32 5, %v1317
        %v1319 = vrot.slane %v553, %v1318
        %v1320 = vmul.f32 %v549, %v1319
        %v1321 = vmul.f32 %v539, %v1319
        %v1322 = vmul.f32 %v541, %v1319
        %v1323 = vmul.f32 %v543, %v1319
        %v1324 = vmul.f32 %v550, %v1319
        %v1330 = vrot.slane %v1320, 5
        %v1331 = vrot.slane %v1321, 5
        %v1332 = vsel %vm536, %v1330, %v1331
        %v1333 = vrot.slane %v1322, 5
        %v1334 = vsel %vm536, %v1331, %v1333
        %v1335 = vrot.slane %v1323, 5
        %v1336 = vsel %vm536, %v1333, %v1335
        %v1337 = vrot.slane %v1324, 5
        %v1338 = vsel %vm536, %v1335, %v1337
        %v1343 = vadd.f32 %v1312, %v1332
        %v1344 = vadd.f32 %v1313, %v1334
        %v1345 = vadd.f32 %v1314, %v1336
        %v1346 = vadd.f32 %v1315, %v1338
        %v1347 = vlaneseq
        %v1348 = vshrl.u32 %v1347, 7
        %v1349 = vsub.s32 6, %v1348
        %v1350 = vrot.slane %v553, %v1349
        %v1351 = vmul.f32 %v549, %v1350
        %v1352 = vmul.f32 %v539, %v1350
        %v1353 = vmul.f32 %v541, %v1350
        %v1354 = vmul.f32 %v543, %v1350
        %v1355 = vmul.f32 %v550, %v1350
        %v1361 = vrot.slane %v1351, 6
        %v1362 = vrot.slane %v1352, 6
        %v1363 = vsel %vm737, %v1361, %v1362
        %v1364 = vrot.slane %v1353, 6
        %v1365 = vsel %vm737, %v1362, %v1364
        %v1366 = vrot.slane %v1354, 6
        %v1367 = vsel %vm737, %v1364, %v1366
        %v1368 = vrot.slane %v1355, 6
        %v1369 = vsel %vm737, %v1366, %v1368
        %v1374 = vadd.f32 %v1343, %v1363
        %v1375 = vadd.f32 %v1344, %v1365
        %v1376 = vadd.f32 %v1345, %v1367
        %v1377 = vadd.f32 %v1346, %v1369
        %v1378 = vlaneseq
        %v1379 = vshrl.u32 %v1378, 7
        %v1380 = vsub.s32 2, %v1379
        %v1381 = vrot.slane %v555, %v1380
        %v1382 = vadd.f32 %v1374, %v1381
        %v1383 = vadd.f32 %v1375, %v1381
        %v1384 = vadd.f32 %v1376, %v1381
        %v1385 = vadd.f32 %v1377, %v1381
        %v1386 = vmul.f32 %v1382, 0.3
        %v1387 = vmul.f32 %v1383, 0.3
        %v1388 = vmul.f32 %v1384, 0.3
        %v1389 = vmul.f32 %v1385, 0.3
        %v1390 = vmax.f32 %v1382, %v1386
        %v1391 = vmax.f32 %v1383, %v1387
        %v1392 = vmax.f32 %v1384, %v1388
        %v1393 = vmax.f32 %v1385, %v1389
        %s1394 = scalar_lea.vmem [#allocation5], 256
        %v1395 = vld [vmem:[%s1394] sm:$0xff]
        %v1396 = vld [vmem:[%s1394 + $0x8] sm:$0xff]
        %v1397 = vld [vmem:[%s1394 + $0x10] sm:$0xff]
        %v1398 = vld [vmem:[%s1394 + $0x18] sm:$0xff]
        %v1399 = vld [vmem:[%s1394 + $0x20] sm:$0xff]
        %v1400 = vld [vmem:[%s1394 + $0x28] sm:$0xff]
        %v1401 = vld [vmem:[%s1394 + $0x30] sm:$0xff]
        %v1402 = vld [vmem:[%s1394 + $0x38] sm:$0xff]
        %v1403 = vld [vmem:[%s1394 + $0x40] sm:$0xff]
        %v1404 = vld [vmem:[%s1394 + $0x48] sm:$0xff]
        %v1405 = vld [vmem:[%s1394 + $0x50] sm:$0xff]
        %v1406 = vld [vmem:[%s1394 + $0x58] sm:$0xff]
        %v1407 = vld [vmem:[%s1394 + $0x60] sm:$0xff]
        %v1408 = vld [vmem:[%s1394 + $0x68] sm:$0xff]
        %v1409 = vld [vmem:[%s1394 + $0x70] sm:$0xff]
        %v1410 = vld [vmem:[%s1394 + $0x78] sm:$0xff]
        %1411 = vmatprep.subr.mxu0 0.0
        %1412 = vmatpush1.msra.mxu0 %v1395
        %1413 = vmatprep.subr.mxu0 0.0
        %1414 = vmatpush1.msra.mxu0 %v1396
        %1415 = vmatprep.subr.mxu0 0.0
        %1416 = vmatpush1.msra.mxu0 %v1397
        %1417 = vmatprep.subr.mxu0 0.0
        %1418 = vmatpush1.msra.mxu0 %v1398
        %1419 = vmatprep.subr.mxu0 0.0
        %1420 = vmatpush1.msra.mxu0 %v1399
        %1421 = vmatprep.subr.mxu0 0.0
        %1422 = vmatpush1.msra.mxu0 %v1400
        %1423 = vmatprep.subr.mxu0 0.0
        %1424 = vmatpush1.msra.mxu0 %v1401
        %1425 = vmatprep.subr.mxu0 0.0
        %1426 = vmatpush1.msra.mxu0 %v1402
        %1427 = vmatprep.subr.mxu0 0.0
        %1428 = vmatpush1.msra.mxu0 %v1403
        %1429 = vmatprep.subr.mxu0 0.0
        %1430 = vmatpush1.msra.mxu0 %v1404
        %1431 = vmatprep.subr.mxu0 0.0
        %1432 = vmatpush1.msra.mxu0 %v1405
        %1433 = vmatprep.subr.mxu0 0.0
        %1434 = vmatpush1.msra.mxu0 %v1406
        %1435 = vmatprep.subr.mxu0 0.0
        %1436 = vmatpush1.msra.mxu0 %v1407
        %1437 = vmatprep.subr.mxu0 0.0
        %1438 = vmatpush1.msra.mxu0 %v1408
        %1439 = vmatprep.subr.mxu0 0.0
        %1440 = vmatpush1.msra.mxu0 %v1409
        %1441 = vmatprep.subr.mxu0 0.0
        %1442 = vmatpush1.msra.mxu0 %v1410
        %1443 = vmatprep.subr.mxu0 0.0
        %1444 = vmatpush1.msra.mxu0 0.0
        %1445 = vmatprep.subr.mxu0 0.0
        %1446 = vmatpush1.msra.mxu0 0.0
        %1447 = vmatprep.subr.mxu0 0.0
        %1448 = vmatpush1.msra.mxu0 0.0
        %1449 = vmatprep.subr.mxu0 0.0
        %1450 = vmatpush1.msra.mxu0 0.0
        %1451 = vmatprep.subr.mxu0 0.0
        %1452 = vmatpush1.msra.mxu0 0.0
        %1453 = vmatprep.subr.mxu0 0.0
        %1454 = vmatpush1.msra.mxu0 0.0
        %1455 = vmatprep.subr.mxu0 0.0
        %1456 = vmatpush1.msra.mxu0 0.0
        %1457 = vmatprep.subr.mxu0 0.0
        %1458 = vmatpush1.msra.mxu0 0.0
        %1459 = vmatprep.subr.mxu0 0.0
        %1460 = vmatpush1.msra.mxu0 0.0
        %1461 = vmatprep.subr.mxu0 0.0
        %1462 = vmatpush1.msra.mxu0 0.0
        %1463 = vmatprep.subr.mxu0 0.0
        %1464 = vmatpush1.msra.mxu0 0.0
        %1465 = vmatprep.subr.mxu0 0.0
        %1466 = vmatpush1.msra.mxu0 0.0
        %1467 = vmatprep.subr.mxu0 0.0
        %1468 = vmatpush1.msra.mxu0 0.0
        %1469 = vmatprep.subr.mxu0 0.0
        %1470 = vmatpush1.msra.mxu0 0.0
        %1471 = vmatprep.subr.mxu0 0.0
        %1472 = vmatpush1.msra.mxu0 0.0
        %1473 = vmatprep.subr.mxu0 0.0
        %1474 = vmatpush1.msra.mxu0 0.0
        %1475 = vmatprep.mubr.f32.mxu0 0.0
        %1476 = vmatmul.mubr.f32.gmra.mrb[0].mxu0 %v1390
        %v1477 = vpop.f32.mrb[0].mxu0
        %v1478 = vadd.f32 0.0, %v1477
        %v1479 = vpop.f32.mrb[0].mxu0
        %1480 = vmatprep.mubr.f32.mxu0 0.0
        %1481 = vmatmul.mubr.f32.gmra.mrb[0].mxu0 %v1391
        %v1482 = vpop.f32.mrb[0].mxu0
        %v1483 = vadd.f32 0.0, %v1482
        %v1484 = vpop.f32.mrb[0].mxu0
        %1485 = vmatprep.mubr.f32.mxu0 0.0
        %1486 = vmatmul.mubr.f32.gmra.mrb[0].mxu0 %v1392
        %v1487 = vpop.f32.mrb[0].mxu0
        %v1488 = vadd.f32 0.0, %v1487
        %v1489 = vpop.f32.mrb[0].mxu0
        %1490 = vmatprep.mubr.f32.mxu0 0.0
        %1491 = vmatmul.mubr.f32.gmra.mrb[0].mxu0 %v1393
        %v1492 = vpop.f32.mrb[0].mxu0
        %v1493 = vadd.f32 0.0, %v1492
        %v1494 = vpop.f32.mrb[0].mxu0
        %1495 = vdwg.mxu0
        %v1496 = vadd.f32 %v1166, %v1478
        %v1497 = vadd.f32 %v1171, %v1483
        %v1498 = vadd.f32 %v1176, %v1488
        %v1499 = vadd.f32 %v1181, %v1493
        %v1500 = vlaneseq
        %v1501 = vshrl.u32 %v1500, 7
        %v1502 = vsub.s32 0, %v1501
        %v1503 = vrot.slane %v554, %v1502
        %v1504 = vmul.f32 %v549, %v1503
        %v1505 = vmul.f32 %v539, %v1503
        %v1506 = vmul.f32 %v541, %v1503
        %v1507 = vmul.f32 %v543, %v1503
        %v1508 = vlaneseq
        %v1509 = vshrl.u32 %v1508, 7
        %v1510 = vsub.s32 1, %v1509
        %v1511 = vrot.slane %v554, %v1510
        %v1512 = vmul.f32 %v549, %v1511
        %v1513 = vmul.f32 %v539, %v1511
        %v1514 = vmul.f32 %v541, %v1511
        %v1515 = vmul.f32 %v543, %v1511
        %v1516 = vmul.f32 %v550, %v1511
        %v1522 = vrot.slane %v1512, 1
        %v1523 = vrot.slane %v1513, 1
        %v1524 = vsel %vm578, %v1522, %v1523
        %v1525 = vrot.slane %v1514, 1
        %v1526 = vsel %vm578, %v1523, %v1525
        %v1527 = vrot.slane %v1515, 1
        %v1528 = vsel %vm578, %v1525, %v1527
        %v1529 = vrot.slane %v1516, 1
        %v1530 = vsel %vm578, %v1527, %v1529
        %v1535 = vadd.f32 %v1504, %v1524
        %v1536 = vadd.f32 %v1505, %v1526
        %v1537 = vadd.f32 %v1506, %v1528
        %v1538 = vadd.f32 %v1507, %v1530
        %v1539 = vlaneseq
        %v1540 = vshrl.u32 %v1539, 7
        %v1541 = vsub.s32 2, %v1540
        %v1542 = vrot.slane %v554, %v1541
        %v1543 = vmul.f32 %v549, %v1542
        %v1544 = vmul.f32 %v539, %v1542
        %v1545 = vmul.f32 %v541, %v1542
        %v1546 = vmul.f32 %v543, %v1542
        %v1547 = vmul.f32 %v550, %v1542
        %v1553 = vrot.slane %v1543, 2
        %v1554 = vrot.slane %v1544, 2
        %v1555 = vsel %vm610, %v1553, %v1554
        %v1556 = vrot.slane %v1545, 2
        %v1557 = vsel %vm610, %v1554, %v1556
        %v1558 = vrot.slane %v1546, 2
        %v1559 = vsel %vm610, %v1556, %v1558
        %v1560 = vrot.slane %v1547, 2
        %v1561 = vsel %vm610, %v1558, %v1560
        %v1566 = vadd.f32 %v1535, %v1555
        %v1567 = vadd.f32 %v1536, %v1557
        %v1568 = vadd.f32 %v1537, %v1559
        %v1569 = vadd.f32 %v1538, %v1561
        %v1570 = vlaneseq
        %v1571 = vshrl.u32 %v1570, 7
        %v1572 = vsub.s32 3, %v1571
        %v1573 = vrot.slane %v554, %v1572
        %v1574 = vmul.f32 %v549, %v1573
        %v1575 = vmul.f32 %v539, %v1573
        %v1576 = vmul.f32 %v541, %v1573
        %v1577 = vmul.f32 %v543, %v1573
        %v1578 = vmul.f32 %v550, %v1573
        %v1584 = vrot.slane %v1574, 3
        %v1585 = vrot.slane %v1575, 3
        %v1586 = vsel %vm642, %v1584, %v1585
        %v1587 = vrot.slane %v1576, 3
        %v1588 = vsel %vm642, %v1585, %v1587
        %v1589 = vrot.slane %v1577, 3
        %v1590 = vsel %vm642, %v1587, %v1589
        %v1591 = vrot.slane %v1578, 3
        %v1592 = vsel %vm642, %v1589, %v1591
        %v1597 = vadd.f32 %v1566, %v1586
        %v1598 = vadd.f32 %v1567, %v1588
        %v1599 = vadd.f32 %v1568, %v1590
        %v1600 = vadd.f32 %v1569, %v1592
        %v1601 = vlaneseq
        %v1602 = vshrl.u32 %v1601, 7
        %v1603 = vsub.s32 4, %v1602
        %v1604 = vrot.slane %v554, %v1603
        %v1605 = vmul.f32 %v549, %v1604
        %v1606 = vmul.f32 %v539, %v1604
        %v1607 = vmul.f32 %v541, %v1604
        %v1608 = vmul.f32 %v543, %v1604
        %v1609 = vmul.f32 %v550, %v1604
        %v1615 = vrot.slane %v1605, 4
        %v1616 = vrot.slane %v1606, 4
        %v1617 = vsel %vm674, %v1615, %v1616
        %v1618 = vrot.slane %v1607, 4
        %v1619 = vsel %vm674, %v1616, %v1618
        %v1620 = vrot.slane %v1608, 4
        %v1621 = vsel %vm674, %v1618, %v1620
        %v1622 = vrot.slane %v1609, 4
        %v1623 = vsel %vm674, %v1620, %v1622
        %v1628 = vadd.f32 %v1597, %v1617
        %v1629 = vadd.f32 %v1598, %v1619
        %v1630 = vadd.f32 %v1599, %v1621
        %v1631 = vadd.f32 %v1600, %v1623
        %v1632 = vlaneseq
        %v1633 = vshrl.u32 %v1632, 7
        %v1634 = vsub.s32 5, %v1633
        %v1635 = vrot.slane %v554, %v1634
        %v1636 = vmul.f32 %v549, %v1635
        %v1637 = vmul.f32 %v539, %v1635
        %v1638 = vmul.f32 %v541, %v1635
        %v1639 = vmul.f32 %v543, %v1635
        %v1640 = vmul.f32 %v550, %v1635
        %v1646 = vrot.slane %v1636, 5
        %v1647 = vrot.slane %v1637, 5
        %v1648 = vsel %vm536, %v1646, %v1647
        %v1649 = vrot.slane %v1638, 5
        %v1650 = vsel %vm536, %v1647, %v1649
        %v1651 = vrot.slane %v1639, 5
        %v1652 = vsel %vm536, %v1649, %v1651
        %v1653 = vrot.slane %v1640, 5
        %v1654 = vsel %vm536, %v1651, %v1653
        %v1659 = vadd.f32 %v1628, %v1648
        %v1660 = vadd.f32 %v1629, %v1650
        %v1661 = vadd.f32 %v1630, %v1652
        %v1662 = vadd.f32 %v1631, %v1654
        %v1663 = vlaneseq
        %v1664 = vshrl.u32 %v1663, 7
        %v1665 = vsub.s32 6, %v1664
        %v1666 = vrot.slane %v554, %v1665
        %v1667 = vmul.f32 %v549, %v1666
        %v1668 = vmul.f32 %v539, %v1666
        %v1669 = vmul.f32 %v541, %v1666
        %v1670 = vmul.f32 %v543, %v1666
        %v1671 = vmul.f32 %v550, %v1666
        %v1677 = vrot.slane %v1667, 6
        %v1678 = vrot.slane %v1668, 6
        %v1679 = vsel %vm737, %v1677, %v1678
        %v1680 = vrot.slane %v1669, 6
        %v1681 = vsel %vm737, %v1678, %v1680
        %v1682 = vrot.slane %v1670, 6
        %v1683 = vsel %vm737, %v1680, %v1682
        %v1684 = vrot.slane %v1671, 6
        %v1685 = vsel %vm737, %v1682, %v1684
        %v1690 = vadd.f32 %v1659, %v1679
        %v1691 = vadd.f32 %v1660, %v1681
        %v1692 = vadd.f32 %v1661, %v1683
        %v1693 = vadd.f32 %v1662, %v1685
        %v1694 = vlaneseq
        %v1695 = vshrl.u32 %v1694, 7
        %v1696 = vsub.s32 3, %v1695
        %v1697 = vrot.slane %v555, %v1696
        %v1698 = vadd.f32 %v1690, %v1697
        %v1699 = vadd.f32 %v1691, %v1697
        %v1700 = vadd.f32 %v1692, %v1697
        %v1701 = vadd.f32 %v1693, %v1697
        %v1702 = vmul.f32 %v1698, 0.3
        %v1703 = vmul.f32 %v1699, 0.3
        %v1704 = vmul.f32 %v1700, 0.3
        %v1705 = vmul.f32 %v1701, 0.3
        %v1706 = vmax.f32 %v1698, %v1702
        %v1707 = vmax.f32 %v1699, %v1703
        %v1708 = vmax.f32 %v1700, %v1704
        %v1709 = vmax.f32 %v1701, %v1705
        %s1710 = scalar_lea.vmem [#allocation5], 384
        %v1711 = vld [vmem:[%s1710] sm:$0xff]
        %v1712 = vld [vmem:[%s1710 + $0x8] sm:$0xff]
        %v1713 = vld [vmem:[%s1710 + $0x10] sm:$0xff]
        %v1714 = vld [vmem:[%s1710 + $0x18] sm:$0xff]
        %v1715 = vld [vmem:[%s1710 + $0x20] sm:$0xff]
        %v1716 = vld [vmem:[%s1710 + $0x28] sm:$0xff]
        %v1717 = vld [vmem:[%s1710 + $0x30] sm:$0xff]
        %v1718 = vld [vmem:[%s1710 + $0x38] sm:$0xff]
        %v1719 = vld [vmem:[%s1710 + $0x40] sm:$0xff]
        %v1720 = vld [vmem:[%s1710 + $0x48] sm:$0xff]
        %v1721 = vld [vmem:[%s1710 + $0x50] sm:$0xff]
        %v1722 = vld [vmem:[%s1710 + $0x58] sm:$0xff]
        %v1723 = vld [vmem:[%s1710 + $0x60] sm:$0xff]
        %v1724 = vld [vmem:[%s1710 + $0x68] sm:$0xff]
        %v1725 = vld [vmem:[%s1710 + $0x70] sm:$0xff]
        %v1726 = vld [vmem:[%s1710 + $0x78] sm:$0xff]
        %1727 = vmatprep.subr.mxu0 0.0
        %1728 = vmatpush1.msra.mxu0 %v1711
        %1729 = vmatprep.subr.mxu0 0.0
        %1730 = vmatpush1.msra.mxu0 %v1712
        %1731 = vmatprep.subr.mxu0 0.0
        %1732 = vmatpush1.msra.mxu0 %v1713
        %1733 = vmatprep.subr.mxu0 0.0
        %1734 = vmatpush1.msra.mxu0 %v1714
        %1735 = vmatprep.subr.mxu0 0.0
        %1736 = vmatpush1.msra.mxu0 %v1715
        %1737 = vmatprep.subr.mxu0 0.0
        %1738 = vmatpush1.msra.mxu0 %v1716
        %1739 = vmatprep.subr.mxu0 0.0
        %1740 = vmatpush1.msra.mxu0 %v1717
        %1741 = vmatprep.subr.mxu0 0.0
        %1742 = vmatpush1.msra.mxu0 %v1718
        %1743 = vmatprep.subr.mxu0 0.0
        %1744 = vmatpush1.msra.mxu0 %v1719
        %1745 = vmatprep.subr.mxu0 0.0
        %1746 = vmatpush1.msra.mxu0 %v1720
        %1747 = vmatprep.subr.mxu0 0.0
        %1748 = vmatpush1.msra.mxu0 %v1721
        %1749 = vmatprep.subr.mxu0 0.0
        %1750 = vmatpush1.msra.mxu0 %v1722
        %1751 = vmatprep.subr.mxu0 0.0
        %1752 = vmatpush1.msra.mxu0 %v1723
        %1753 = vmatprep.subr.mxu0 0.0
        %1754 = vmatpush1.msra.mxu0 %v1724
        %1755 = vmatprep.subr.mxu0 0.0
        %1756 = vmatpush1.msra.mxu0 %v1725
        %1757 = vmatprep.subr.mxu0 0.0
        %1758 = vmatpush1.msra.mxu0 %v1726
        %1759 = vmatprep.subr.mxu0 0.0
        %1760 = vmatpush1.msra.mxu0 0.0
        %1761 = vmatprep.subr.mxu0 0.0
        %1762 = vmatpush1.msra.mxu0 0.0
        %1763 = vmatprep.subr.mxu0 0.0
        %1764 = vmatpush1.msra.mxu0 0.0
        %1765 = vmatprep.subr.mxu0 0.0
        %1766 = vmatpush1.msra.mxu0 0.0
        %1767 = vmatprep.subr.mxu0 0.0
        %1768 = vmatpush1.msra.mxu0 0.0
        %1769 = vmatprep.subr.mxu0 0.0
        %1770 = vmatpush1.msra.mxu0 0.0
        %1771 = vmatprep.subr.mxu0 0.0
        %1772 = vmatpush1.msra.mxu0 0.0
        %1773 = vmatprep.subr.mxu0 0.0
        %1774 = vmatpush1.msra.mxu0 0.0
        %1775 = vmatprep.subr.mxu0 0.0
        %1776 = vmatpush1.msra.mxu0 0.0
        %1777 = vmatprep.subr.mxu0 0.0
        %1778 = vmatpush1.msra.mxu0 0.0
        %1779 = vmatprep.subr.mxu0 0.0
        %1780 = vmatpush1.msra.mxu0 0.0
        %1781 = vmatprep.subr.mxu0 0.0
        %1782 = vmatpush1.msra.mxu0 0.0
        %1783 = vmatprep.subr.mxu0 0.0
        %1784 = vmatpush1.msra.mxu0 0.0
        %1785 = vmatprep.subr.mxu0 0.0
        %1786 = vmatpush1.msra.mxu0 0.0
        %1787 = vmatprep.subr.mxu0 0.0
        %1788 = vmatpush1.msra.mxu0 0.0
        %1789 = vmatprep.subr.mxu0 0.0
        %1790 = vmatpush1.msra.mxu0 0.0
        %1791 = vmatprep.mubr.f32.mxu0 0.0
        %1792 = vmatmul.mubr.f32.gmra.mrb[0].mxu0 %v1706
        %v1793 = vpop.f32.mrb[0].mxu0
        %v1794 = vadd.f32 0.0, %v1793
        %v1795 = vpop.f32.mrb[0].mxu0
        %1796 = vmatprep.mubr.f32.mxu0 0.0
        %1797 = vmatmul.mubr.f32.gmra.mrb[0].mxu0 %v1707
        %v1798 = vpop.f32.mrb[0].mxu0
        %v1799 = vadd.f32 0.0, %v1798
        %v1800 = vpop.f32.mrb[0].mxu0
        %1801 = vmatprep.mubr.f32.mxu0 0.0
        %1802 = vmatmul.mubr.f32.gmra.mrb[0].mxu0 %v1708
        %v1803 = vpop.f32.mrb[0].mxu0
        %v1804 = vadd.f32 0.0, %v1803
        %v1805 = vpop.f32.mrb[0].mxu0
        %1806 = vmatprep.mubr.f32.mxu0 0.0
        %1807 = vmatmul.mubr.f32.gmra.mrb[0].mxu0 %v1709
        %v1808 = vpop.f32.mrb[0].mxu0
        %v1809 = vadd.f32 0.0, %v1808
        %v1810 = vpop.f32.mrb[0].mxu0
        %1811 = vdwg.mxu0
        %v1812 = vadd.f32 %v1496, %v1794
        %v1813 = vadd.f32 %v1497, %v1799
        %v1814 = vadd.f32 %v1498, %v1804
        %v1815 = vadd.f32 %v1499, %v1809
        %v1816 = vld [vmem:[%s7] sm:$0x1]
        %v1818 = vlaneseq
        %v1819 = vshrl.u32 %v1818, 7
        %v1820 = vsub.s32 0, %v1819
        %v1821 = vrot.slane %v1816, %v1820
        %v1823 = vadd.f32 %v1812, %v1821
        %v1824 = vadd.f32 %v1813, %v1821
        %v1825 = vadd.f32 %v1814, %v1821
        %v1826 = vadd.f32 %v1815, %v1821
        %1827 = vst [vmem:[%s385] sm:$0xff] %v1823
        %1828 = vst [vmem:[%s385 + $0x8] sm:$0xff] %v1824
        %1829 = vst [vmem:[%s385 + $0x10] sm:$0xff] %v1825
        %1830 = vst [vmem:[%s385 + $0x18] sm:$0xff] %v1826
        %s1831 = sand.u32 %s230, 1
        %s1832 = scalar_lea.sflag [#allocation4], %s1831
        %s1833 = sand.u32 %s230, 1
        %s1834 = smul.addr %s1833, 32
        %s1835 = scalar_lea.vmem [#allocation7], %s1834
        // Predicated region
        $region61: #{tpu_custom_call.1} parent=51 // pred_check
          %p1836 = pneg %p240
        $region62: #{tpu_custom_call.1} parent=51 // pred_check_branch
          %1838 = sbr.rel (%p1836) target = $region64
        $region63: #{tpu_custom_call.1} parent=51 // pred_region
          %s1839 = smul.u32 4, %s31
          %s1840 = ssub.s32 9, %s1839
          %p1841 = scmp.lt.s32.totalorder %s1840, 4
          %s1842 = scalar_select %p1841, %s1840, 4
          %s1843 = smul.u32 128, %s1842
          %s1845 = ssub.s32 512, %s1843
          %1846 = vsyncadd %s1832, %s1845
          %p1847 = scmp.ne.s32.totalorder 0, %s1843
          %s1848 = smul.addr %s30, 9
          %s1849 = sadd.s32 %s1839, %s1848
          %s1850 = smul.addr %s1849, 128
          %s1851 = scalar_lea.hbm %s8, %s1850
          %s1852 = smul.u32 8, %s1842
          %s1853 = sshll.u32 %s1835, 4
          %s1854 = int_to_ptr.vmem [resolvable:$true] %s1853
          %s1855 = sshll.u32 %s1852, 4
          %1859 = dma.vmem_to_hbm [thread:$0]  (%p1847), %s1854, %s1855, %s1851, %s1832, 128, 128, 8
        $region64: #{tpu_custom_call.1} parent=51 // pred_fallthru
          _
      $region52: #{tpu_custom_call.1} parent=5 // pred_fallthru
        _
      %p1860 = scmp.le.s32.totalorder 2, %s21
      // Predicated region
      $region65: #{tpu_custom_call.1} parent=5 // pred_check
        %p1861 = pneg %p1860
      $region66: #{tpu_custom_call.1} parent=5 // pred_check_branch
        %1863 = sbr.rel (%p1861) target = $region68
      $region67: #{tpu_custom_call.1} parent=5 // pred_region
        %s1864 = ssub.s32 %s21, 2
        // Predicated region
        $region69: #{tpu_custom_call.1} parent=67 // pred_check
          %p1865 = pneg %p246
        $region70: #{tpu_custom_call.1} parent=67 // pred_check_branch
          %1867 = sbr.rel (%p1865) target = $region72
        $region71: #{tpu_custom_call.1} parent=67 // pred_region
          %s1868 = sand.u32 %s231, 1
          %s1869 = scalar_lea.sflag [#allocation4], %s1868
          %s1870 = sand.u32 %s231, 1
          %s1871 = smul.addr %s1870, 32
          %s1872 = scalar_lea.vmem [#allocation7], %s1871
          %1873 = dma.done %s1869, 512
        $region72: #{tpu_custom_call.1} parent=67 // pred_fallthru
          _
      $region68: #{tpu_custom_call.1} parent=5 // pred_fallthru
        _
    $region6: #{tpu_custom_call.1} parent=1 // loop_footer
      %s25 = sadd.s32 1, %s21
    $region7: #{tpu_custom_call.1} parent=1 // loop_footer_branch
      %20 = sbr.rel target = $region3
    $region8: #{tpu_custom_call.1} parent=1 // loop_exit
      _
    %1874 = vsyncpa [#allocation3], 1
    %s1875 = scalar_lea.sflag [#allocation3], 1
    %1876 = vsyncpa %s1875, 1
    %1877 = vsyncpa [#allocation6], 1
    %1878 = vsyncpa [#allocation4], 1
    %s1879 = scalar_lea.sflag [#allocation4], 1
    %1880 = vsyncpa %s1879, 1

</llo_original>
